<compile_context>
chip_gen: v6e
topology: v6e:2x2x1
jax: 0.10.0
libtpu: 0.0.40
codegen_flags: <defaults>
</compile_context>

<pallas_src>
import jax
import jax.numpy as jnp
from jax import lax
from jax.experimental import pallas as pl
from jax.experimental.pallas import tpu as pltpu


# ----------------------------------------------------------------------------
# Fused kernel: BN1+ReLU -> conv1x1 -> (BN2 folded)+ReLU -> conv3x3 -> concat.
#   x_ref : (1, H, W, Cin)     f32 input tile (one image, NHWC)
#   s1/b1 : (1, Cin)           folded BN1 scale / shift (f32)
#   w1    : (Cin, Cmid)        conv1 weight with BN2 scale folded in (bf16)
#   b2    : (1, Cmid)          BN2 shift (f32)
#   w2    : (9*Cmid, G)        3x3 conv weight as im2col matrix (bf16)
#   o_ref : (1, H, W, Cin+G)   f32 output tile = [x | branch] on the lane axis
# ----------------------------------------------------------------------------
def _dense_unit_kernel(x_ref, s1_ref, b1_ref, w1_ref, b2_ref, w2_ref, o_ref):
    _, H, W, Cin = x_ref.shape
    Cmid = w1_ref.shape[1]
    G = w2_ref.shape[1]

    x = x_ref[0]                                                  # (H, W, Cin)

    # --- BN1 + ReLU in f32 (VPU); bf16 only for the MXU operands. -----------
    a1 = jnp.maximum(x * s1_ref[0] + b1_ref[0], 0.0)
    a1 = a1.reshape(H * W, Cin).astype(jnp.bfloat16)

    # --- 1x1 conv; BN2 scale pre-folded into w1, shift added as a bias. -----
    y1 = jnp.dot(a1, w1_ref[...], preferred_element_type=jnp.float32)
    a2 = jnp.maximum(y1 + b2_ref[...], 0.0)                       # (H*W, Cmid)
    a2 = a2.reshape(H, W, Cmid)

    # --- zero-padded spatial frame built from values (no scratch fill). -----
    zrow = jnp.zeros((1, W, Cmid), a2.dtype)
    a2p = jnp.concatenate([zrow, a2, zrow], axis=0)               # (H+2, W,  C)
    zcol = jnp.zeros((H + 2, 1, Cmid), a2.dtype)
    a2p = jnp.concatenate([zcol, a2p, zcol], axis=1)              # (H+2, W+2,C)

    # --- im2col: ONE K = 9*Cmid matmul instead of 9 short-K matmuls. --------
    cols = [a2p[dy:dy + H, dx:dx + W, :] for dy in range(3) for dx in range(3)]
    im2col = jnp.concatenate(cols, axis=-1).reshape(H * W, 9 * Cmid)
    y2 = jnp.dot(im2col.astype(jnp.bfloat16), w2_ref[...],
                 preferred_element_type=jnp.float32)              # (H*W, G)

    # --- channel concat done in-kernel; single full-block store. ------------
    o_ref[0] = jnp.concatenate(
        [x, y2.reshape(H, W, G).astype(x.dtype)], axis=-1)


def _fold_bn(gamma, beta, mean, var, eps=1e-5):
    scale = gamma / jnp.sqrt(var + eps)
    shift = beta - mean * scale
    return scale[None, :], shift[None, :]                         # (1, C)


def dense_unit_forward_nhwc(x_nhwc, params):
    """DenseUnit forward, NHWC in / NHWC out (concat along the last axis)."""
    N, H, W, Cin = x_nhwc.shape
    w1 = params["conv1_w"]                                        # (Cmid, Cin, 1, 1)
    w2 = params["conv2_w"]                                        # (G, Cmid, 3, 3)
    Cmid, G = w1.shape[0], w2.shape[0]
    Cout = Cin + G

    scale1, shift1 = _fold_bn(params["bn1_gamma"], params["bn1_beta"],
                              params["bn1_mean"], params["bn1_var"])
    scale2, shift2 = _fold_bn(params["bn2_gamma"], params["bn2_beta"],
                              params["bn2_mean"], params["bn2_var"])

    # Fold BN2 scale into conv1 weights: (a1 @ W1) * s2 == a1 @ (W1 * s2).
    w1_mat = (jnp.transpose(w1[:, :, 0, 0], (1, 0)) * scale2).astype(jnp.bfloat16)
    # (out, in, kh, kw) -> (kh, kw, in, out) -> (9*Cmid, G) im2col matrix.
    w2_mat = jnp.transpose(w2, (2, 3, 1, 0)).reshape(9 * Cmid, G).astype(jnp.bfloat16)

    # TODO(synk): for production-sized DenseNet feature maps (e.g. H=W=56,
    # Cmid=128) tile H with a 1-row halo and set vmem_limit_bytes so the
    # working set fits v7x's 64 MiB VMEM; whole-image-per-grid-step blocks
    # here are sized for the small test shapes.
    out = pl.pallas_call(
        _dense_unit_kernel,
        out_shape=jax.ShapeDtypeStruct((N, H, W, Cout), x_nhwc.dtype),
        grid=(N,),
        in_specs=[
            pl.BlockSpec((1, H, W, Cin), lambda n: (n, 0, 0, 0)),
            pl.BlockSpec((1, Cin), lambda n: (0, 0)),
            pl.BlockSpec((1, Cin), lambda n: (0, 0)),
            pl.BlockSpec((Cin, Cmid), lambda n: (0, 0)),
            pl.BlockSpec((1, Cmid), lambda n: (0, 0)),
            pl.BlockSpec((9 * Cmid, G), lambda n: (0, 0)),
        ],
        out_specs=pl.BlockSpec((1, H, W, Cout), lambda n: (n, 0, 0, 0)),
        compiler_params=pltpu.CompilerParams(
            dimension_semantics=("parallel",)),
    )(x_nhwc, scale1, shift1, w1_mat, shift2, w2_mat)

    # TODO(synk): training-mode Dropout(p=0.5) would need pltpu.prng_* masking;
    # eval-mode (identity) semantics are implemented here.
    return out


def dense_unit_forward(x_nchw, params):
    """PyTorch-layout wrapper: NCHW in, NCHW out (channel-axis concat)."""
    x_nhwc = jnp.transpose(x_nchw, (0, 2, 3, 1))
    out_nhwc = dense_unit_forward_nhwc(x_nhwc, params)
    return jnp.transpose(out_nhwc, (0, 3, 1, 2))


# ----------------------------------------------------------------------------
# Pure-JAX reference (for sanity checking the Pallas path).
# ----------------------------------------------------------------------------
def dense_unit_reference(x, params):
    def bn_relu(v, g, b, m, var):
        s = g / jnp.sqrt(var + 1e-5)
        return jnp.maximum(v * s[None, :, None, None]
                           + (b - m * s)[None, :, None, None], 0.0)

    a1 = bn_relu(x, params["bn1_gamma"], params["bn1_beta"],
                 params["bn1_mean"], params["bn1_var"])
    y1 = lax.conv_general_dilated(a1, params["conv1_w"], (1, 1), "VALID",
                                  dimension_numbers=("NCHW", "OIHW", "NCHW"))
    a2 = bn_relu(y1, params["bn2_gamma"], params["bn2_beta"],
                 params["bn2_mean"], params["bn2_var"])
    y2 = lax.conv_general_dilated(a2, params["conv2_w"], (1, 1),
                                  ((1, 1), (1, 1)),
                                  dimension_numbers=("NCHW", "OIHW", "NCHW"))
    return jnp.concatenate([x, y2], axis=1)


def init_params(key, in_channels, growth_rate, bn_size):
    mid = growth_rate * bn_size
    ks = jax.random.split(key, 10)
    return {
        "bn1_gamma": jax.random.uniform(ks[0], (in_channels,), jnp.float32, 0.5, 1.5),
        "bn1_beta": jax.random.normal(ks[1], (in_channels,), jnp.float32) * 0.1,
        "bn1_mean": jax.random.normal(ks[2], (in_channels,), jnp.float32) * 0.1,
        "bn1_var": jax.random.uniform(ks[3], (in_channels,), jnp.float32, 0.5, 1.5),
        "conv1_w": jax.random.normal(ks[4], (mid, in_channels, 1, 1), jnp.float32) * 0.1,
        "bn2_gamma": jax.random.uniform(ks[5], (mid,), jnp.float32, 0.5, 1.5),
        "bn2_beta": jax.random.normal(ks[6], (mid,), jnp.float32) * 0.1,
        "bn2_mean": jax.random.normal(ks[7], (mid,), jnp.float32) * 0.1,
        "bn2_var": jax.random.uniform(ks[8], (mid,), jnp.float32, 0.5, 1.5),
        "conv2_w": jax.random.normal(ks[9], (growth_rate, mid, 3, 3), jnp.float32) * 0.1,
    }


if __name__ == "__main__":
    # Small DenseUnit: in_channels=16, growth_rate=8, bn_size=4 -> mid=32.
    N, Cin, H, W = 2, 16, 16, 16
    growth_rate, bn_size = 8, 4

    key = jax.random.PRNGKey(0)
    kx, kp = jax.random.split(key)
    x = jax.random.normal(kx, (N, Cin, H, W), jnp.float32)
    params = init_params(kp, Cin, growth_rate, bn_size)

    fwd = jax.jit(dense_unit_forward)
    out = jax.block_until_ready(fwd(x, params))

    assert out.shape == (N, Cin + growth_rate, H, W), out.shape

    ref = jax.block_until_ready(dense_unit_reference(x, params))
    assert jnp.allclose(out, ref, rtol=3e-2, atol=3e-2), (
        float(jnp.max(jnp.abs(out - ref))))

    print("KERNEL_OK")
</pallas_src>

<mosaic_0001>
module attributes {stable_mosaic.version = 11 : i64} {
  func.func @_dense_unit_kernel(%arg0: i32, %arg1: memref<1x16x16x16xf32, #tpu.memory_space<vmem>>, %arg2: memref<1x16xf32, #tpu.memory_space<vmem>>, %arg3: memref<1x16xf32, #tpu.memory_space<vmem>>, %arg4: memref<16x32xbf16, #tpu.memory_space<vmem>>, %arg5: memref<1x32xf32, #tpu.memory_space<vmem>>, %arg6: memref<288x8xbf16, #tpu.memory_space<vmem>>, %arg7: memref<1x16x16x24xf32, #tpu.memory_space<vmem>>) attributes {dimension_semantics = [#tpu.dimension_semantics<parallel>], iteration_bounds = array<i64: 2>, scalar_prefetch = 0 : i64, scratch_operands = 0 : i64, tpu.core_type = #tpu.core_type<tc>, window_params = [{transform_indices = @transform_0, window_bounds = array<i64: 1, 16, 16, 16>}, {pipeline_mode = #tpu.pipeline_mode<synchronous>, transform_indices = @transform_1, window_bounds = array<i64: 1, 16>}, {pipeline_mode = #tpu.pipeline_mode<synchronous>, transform_indices = @transform_2, window_bounds = array<i64: 1, 16>}, {pipeline_mode = #tpu.pipeline_mode<synchronous>, transform_indices = @transform_3, window_bounds = array<i64: 16, 32>}, {pipeline_mode = #tpu.pipeline_mode<synchronous>, transform_indices = @transform_4, window_bounds = array<i64: 1, 32>}, {pipeline_mode = #tpu.pipeline_mode<synchronous>, transform_indices = @transform_5, window_bounds = array<i64: 288, 8>}, {transform_indices = @transform_6, window_bounds = array<i64: 1, 16, 16, 24>}]} {
    %c0 = arith.constant 0 : index
    %c0_0 = arith.constant 0 : index
    %c0_1 = arith.constant 0 : index
    %c0_2 = arith.constant 0 : index
    %0 = vector.load %arg1[%c0, %c0_0, %c0_1, %c0_2] : memref<1x16x16x16xf32, #tpu.memory_space<vmem>>, vector<1x16x16x16xf32>
    %1 = vector.shape_cast %0 : vector<1x16x16x16xf32> to vector<16x16x16xf32>
    %c0_3 = arith.constant 0 : index
    %c0_4 = arith.constant 0 : index
    %2 = vector.load %arg2[%c0_3, %c0_4] : memref<1x16xf32, #tpu.memory_space<vmem>>, vector<1x16xf32>
    %3 = vector.shape_cast %2 : vector<1x16xf32> to vector<16xf32>
    %4 = vector.shape_cast %3 : vector<16xf32> to vector<1x1x16xf32>
    %5 = vector.broadcast %4 : vector<1x1x16xf32> to vector<16x16x16xf32>
    %6 = arith.mulf %1, %5 : vector<16x16x16xf32>
    %c0_5 = arith.constant 0 : index
    %c0_6 = arith.constant 0 : index
    %7 = vector.load %arg3[%c0_5, %c0_6] : memref<1x16xf32, #tpu.memory_space<vmem>>, vector<1x16xf32>
    %8 = vector.shape_cast %7 : vector<1x16xf32> to vector<16xf32>
    %9 = vector.shape_cast %8 : vector<16xf32> to vector<1x1x16xf32>
    %10 = vector.broadcast %9 : vector<1x1x16xf32> to vector<16x16x16xf32>
    %11 = arith.addf %6, %10 : vector<16x16x16xf32>
    %cst = arith.constant 0.000000e+00 : f32
    %12 = vector.broadcast %cst : f32 to vector<16x16x16xf32>
    %13 = arith.maximumf %11, %12 : vector<16x16x16xf32>
    %14 = vector.shape_cast %13 : vector<16x16x16xf32> to vector<256x16xf32>
    %15 = arith.truncf %14 : vector<256x16xf32> to vector<256x16xbf16>
    %c0_7 = arith.constant 0 : index
    %c0_8 = arith.constant 0 : index
    %16 = vector.load %arg4[%c0_7, %c0_8] : memref<16x32xbf16, #tpu.memory_space<vmem>>, vector<16x32xbf16>
    %cst_9 = arith.constant dense<0.000000e+00> : vector<256x32xf32>
    %17 = tpu.matmul %15, %16, %cst_9 {dimension_numbers = #tpu.dot_dimension_numbers<[1], [0], [0], [1], [0, 0, 1, 1], [], []>} : vector<256x16xbf16>, vector<16x32xbf16>, vector<256x32xf32> -> vector<256x32xf32>
    %c0_10 = arith.constant 0 : index
    %c0_11 = arith.constant 0 : index
    %18 = vector.load %arg5[%c0_10, %c0_11] : memref<1x32xf32, #tpu.memory_space<vmem>>, vector<1x32xf32>
    %19 = vector.broadcast %18 : vector<1x32xf32> to vector<256x32xf32>
    %20 = arith.addf %17, %19 : vector<256x32xf32>
    %cst_12 = arith.constant 0.000000e+00 : f32
    %21 = vector.broadcast %cst_12 : f32 to vector<256x32xf32>
    %22 = arith.maximumf %20, %21 : vector<256x32xf32>
    %23 = vector.shape_cast %22 : vector<256x32xf32> to vector<16x16x32xf32>
    %cst_13 = arith.constant 0.000000e+00 : f32
    %24 = vector.broadcast %cst_13 : f32 to vector<1x16x32xf32>
    %25 = tpu.concatenate %24, %23, %24 in 0 : vector<1x16x32xf32>, vector<16x16x32xf32>, vector<1x16x32xf32> -> vector<18x16x32xf32>
    %cst_14 = arith.constant 0.000000e+00 : f32
    %26 = vector.broadcast %cst_14 : f32 to vector<18x1x32xf32>
    %27 = tpu.concatenate %26, %25, %26 in 1 : vector<18x1x32xf32>, vector<18x16x32xf32>, vector<18x1x32xf32> -> vector<18x18x32xf32>
    %28 = vector.extract_strided_slice %27 {offsets = [0, 0, 0], sizes = [16, 16, 32], strides = [1, 1, 1]} : vector<18x18x32xf32> to vector<16x16x32xf32>
    %29 = vector.extract_strided_slice %27 {offsets = [0, 1, 0], sizes = [16, 16, 32], strides = [1, 1, 1]} : vector<18x18x32xf32> to vector<16x16x32xf32>
    %30 = vector.extract_strided_slice %27 {offsets = [0, 2, 0], sizes = [16, 16, 32], strides = [1, 1, 1]} : vector<18x18x32xf32> to vector<16x16x32xf32>
    %31 = vector.extract_strided_slice %27 {offsets = [1, 0, 0], sizes = [16, 16, 32], strides = [1, 1, 1]} : vector<18x18x32xf32> to vector<16x16x32xf32>
    %32 = vector.extract_strided_slice %27 {offsets = [1, 1, 0], sizes = [16, 16, 32], strides = [1, 1, 1]} : vector<18x18x32xf32> to vector<16x16x32xf32>
    %33 = vector.extract_strided_slice %27 {offsets = [1, 2, 0], sizes = [16, 16, 32], strides = [1, 1, 1]} : vector<18x18x32xf32> to vector<16x16x32xf32>
    %34 = vector.extract_strided_slice %27 {offsets = [2, 0, 0], sizes = [16, 16, 32], strides = [1, 1, 1]} : vector<18x18x32xf32> to vector<16x16x32xf32>
    %35 = vector.extract_strided_slice %27 {offsets = [2, 1, 0], sizes = [16, 16, 32], strides = [1, 1, 1]} : vector<18x18x32xf32> to vector<16x16x32xf32>
    %36 = vector.extract_strided_slice %27 {offsets = [2, 2, 0], sizes = [16, 16, 32], strides = [1, 1, 1]} : vector<18x18x32xf32> to vector<16x16x32xf32>
    %37 = tpu.concatenate %28, %29, %30, %31, %32, %33, %34, %35, %36 in 2 : vector<16x16x32xf32>, vector<16x16x32xf32>, vector<16x16x32xf32>, vector<16x16x32xf32>, vector<16x16x32xf32>, vector<16x16x32xf32>, vector<16x16x32xf32>, vector<16x16x32xf32>, vector<16x16x32xf32> -> vector<16x16x288xf32>
    %38 = vector.shape_cast %37 : vector<16x16x288xf32> to vector<256x288xf32>
    %39 = arith.truncf %38 : vector<256x288xf32> to vector<256x288xbf16>
    %c0_15 = arith.constant 0 : index
    %c0_16 = arith.constant 0 : index
    %40 = vector.load %arg6[%c0_15, %c0_16] : memref<288x8xbf16, #tpu.memory_space<vmem>>, vector<288x8xbf16>
    %cst_17 = arith.constant dense<0.000000e+00> : vector<256x8xf32>
    %41 = tpu.matmul %39, %40, %cst_17 {dimension_numbers = #tpu.dot_dimension_numbers<[1], [0], [0], [1], [0, 0, 1, 1], [], []>} : vector<256x288xbf16>, vector<288x8xbf16>, vector<256x8xf32> -> vector<256x8xf32>
    %42 = vector.shape_cast %41 : vector<256x8xf32> to vector<16x16x8xf32>
    %43 = tpu.concatenate %1, %42 in 2 : vector<16x16x16xf32>, vector<16x16x8xf32> -> vector<16x16x24xf32>
    %c0_18 = arith.constant 0 : index
    %c0_19 = arith.constant 0 : index
    %c0_20 = arith.constant 0 : index
    %c0_21 = arith.constant 0 : index
    %44 = vector.load %arg7[%c0_18, %c0_19, %c0_20, %c0_21] : memref<1x16x16x24xf32, #tpu.memory_space<vmem>>, vector<1x16x16x24xf32>
    %45 = vector.shape_cast %44 : vector<1x16x16x24xf32> to vector<16x16x24xf32>
    %46 = vector.shape_cast %43 : vector<16x16x24xf32> to vector<1x16x16x24xf32>
    tpu.vector_store %arg7[%c0_18, %c0_19, %c0_20, %c0_21], %46 {strides = array<i32>} : memref<1x16x16x24xf32, #tpu.memory_space<vmem>>, vector<1x16x16x24xf32>,
    return
  }
  func.func @transform_0(%arg0: i32) -> (i32, i32, i32, i32) {
    %c0_i32 = arith.constant 0 : i32
    %c0_i32_0 = arith.constant 0 : i32
    %c0_i32_1 = arith.constant 0 : i32
    %c0_i32_2 = arith.constant 0 : i32
    return %arg0, %c0_i32, %c0_i32_0, %c0_i32_1 : i32, i32, i32, i32
  }
  func.func @transform_1(%arg0: i32) -> (i32, i32) {
    %c0_i32 = arith.constant 0 : i32
    %c0_i32_0 = arith.constant 0 : i32
    %c0_i32_1 = arith.constant 0 : i32
    return %c0_i32, %c0_i32_0 : i32, i32
  }
  func.func @transform_2(%arg0: i32) -> (i32, i32) {
    %c0_i32 = arith.constant 0 : i32
    %c0_i32_0 = arith.constant 0 : i32
    %c0_i32_1 = arith.constant 0 : i32
    return %c0_i32, %c0_i32_0 : i32, i32
  }
  func.func @transform_3(%arg0: i32) -> (i32, i32) {
    %c0_i32 = arith.constant 0 : i32
    %c0_i32_0 = arith.constant 0 : i32
    %c0_i32_1 = arith.constant 0 : i32
    return %c0_i32, %c0_i32_0 : i32, i32
  }
  func.func @transform_4(%arg0: i32) -> (i32, i32) {
    %c0_i32 = arith.constant 0 : i32
    %c0_i32_0 = arith.constant 0 : i32
    %c0_i32_1 = arith.constant 0 : i32
    return %c0_i32, %c0_i32_0 : i32, i32
  }
  func.func @transform_5(%arg0: i32) -> (i32, i32) {
    %c0_i32 = arith.constant 0 : i32
    %c0_i32_0 = arith.constant 0 : i32
    %c0_i32_1 = arith.constant 0 : i32
    return %c0_i32, %c0_i32_0 : i32, i32
  }
  func.func @transform_6(%arg0: i32) -> (i32, i32, i32, i32) {
    %c0_i32 = arith.constant 0 : i32
    %c0_i32_0 = arith.constant 0 : i32
    %c0_i32_1 = arith.constant 0 : i32
    %c0_i32_2 = arith.constant 0 : i32
    return %arg0, %c0_i32, %c0_i32_0, %c0_i32_1 : i32, i32, i32, i32
  }
}

</mosaic_0001>

<llo_original>
// kernel: dense_unit_forward.1
$region0: #{dense_unit_forward.1}
  #allocation0 [shape = 'u32[]', space=smem, size = 0x4, offset = 0x4, fixed_abs, tag = 'smem constant byte address 0x4 - core index']
  #allocation1 [shape = 'u32[144,128]{1,0:T(1,128)}', space=vmem, size = 0x12000, scoped, tag = 'internal scratch']
  %s0 = inlined_call_operand.vmem [shape: f32[2,16,16,16], index: 0, kind: input, shape index: {}]
  %s1 = inlined_call_operand.vmem [shape: f32[1,16], index: 1, kind: input, shape index: {}]
  %s2 = inlined_call_operand.vmem [shape: f32[1,16], index: 2, kind: input, shape index: {}]
  %s3 = inlined_call_operand.vmem [shape: bf16[16,32], index: 3, kind: input, shape index: {}]
  %s4 = inlined_call_operand.vmem [shape: f32[1,32], index: 4, kind: input, shape index: {}]
  %s5 = inlined_call_operand.vmem [shape: bf16[288,8], index: 5, kind: input, shape index: {}]
  %s6 = inlined_call_operand.hbm [shape: f32[2,16,16,24], index: 6, kind: output, shape index: {}]
  %s7 = sld [smem:[#allocation0]]
  $region57: #{dense_unit_forward.1} parent=0
    _
  %s9 = ssub.s32 1, %s7
  %s10 = scalar_select 0, %s9, %s7
  $region1: #{dense_unit_forward.1} parent=0
    #allocation2 [shape = 'u8[262144]{0}', space=vmem, size = 0x40000, scoped, tag = 'output window, operand 0']
    #allocation3 [shape = 's32[2]{0}', space=sflag, size = 0x8, scoped, tag = 'scoped memory for dense_unit_forward.1']
    %11 = vsyncpa [#allocation3], 0
    %s12 = scalar_lea.sflag [#allocation3], 1
    %13 = vsyncpa %s12, 0
    loop: start=0, step=1, limit=4
    $region2: #{dense_unit_forward.1} parent=1 // loop_pre_header
      _
    $region3: #{dense_unit_forward.1} parent=1 // loop_header
      %s15 = sphi 0, %s19
      %p16 = scmp.ge.s32.totalorder %s15, 4
      %s25 = sphi 0, %s27
      %s28 = sphi 0, %s25
      %s29 = sphi 0, %s28
      %s45 = sphi 0, %s29
      %s49 = sphi 0, %s49
      %s51 = sphi 0, %s49
      %s52 = sphi 0, %s51
      %s66 = sphi 0, %s52
      %s70 = sphi 0, %s70
      %s72 = sphi 0, %s70
      %s73 = sphi 0, %s72
      %s87 = sphi 0, %s73
      %s91 = sphi 0, %s91
      %s93 = sphi 0, %s91
      %s94 = sphi 0, %s93
      %s108 = sphi 0, %s94
      %s112 = sphi 0, %s112
      %s114 = sphi 0, %s112
      %s115 = sphi 0, %s114
      %s129 = sphi 0, %s115
      %s133 = sphi 0, %s133
      %s135 = sphi 0, %s133
      %s136 = sphi 0, %s135
      %s150 = sphi 0, %s136
      %s156 = sphi 0, %s158
      %s159 = sphi 0, %s156
      %s160 = sphi 0, %s159
      %s176 = sphi 0, %s160
    $region4: #{dense_unit_forward.1} parent=1 // loop_header_branch
      %18 = sbr.rel (%p16) target = $region8
    $region5: #{dense_unit_forward.1} parent=1 // loop_body
      %s20 = ssub.s32 %s15, 1
      %s21 = ssub.s32 %s15, 2
      %s22 = sadd.s32 %s15, 1
      %s23 = ssub.s32 %s15, %s22
      %p24 = scmp.eq.s32.totalorder %s23, 0
      %s26 = sadd.s32 %s25, 1
      %s27 = scalar_select %p24, %s25, %s26
      %p30 = pneg %p24
      %p31 = scmp.eq.s32.totalorder %s15, 1
      %p32 = por %p30, %p31
      %p33 = scmp.ne.s32.totalorder %s25, %s28
      %p34 = scmp.eq.s32.totalorder %s15, 0
      %p35 = por %p33, %p34
      %p36 = scmp.ne.s32.totalorder %s25, %s28
      %p37 = scmp.eq.s32.totalorder %s20, 1
      %p38 = por %p36, %p37
      %p39 = scmp.ne.s32.totalorder %s28, %s29
      %p40 = scmp.eq.s32.totalorder %s20, 0
      %p41 = por %p39, %p40
      %p42 = scmp.ne.s32.totalorder %s28, %s29
      %p43 = scmp.eq.s32.totalorder %s21, 1
      %p44 = por %p42, %p43
      %p46 = scmp.ne.s32.totalorder %s29, %s45
      %p47 = scmp.eq.s32.totalorder %s21, 0
      %p48 = por %p46, %p47
      %s50 = sadd.s32 %s49, 1
      %p53 = scmp.eq.s32.totalorder %s15, 1
      %p54 = scmp.ne.s32.totalorder %s49, %s51
      %p55 = scmp.eq.s32.totalorder %s15, 0
      %p56 = por %p54, %p55
      %p57 = scmp.ne.s32.totalorder %s49, %s51
      %p58 = scmp.eq.s32.totalorder %s20, 1
      %p59 = por %p57, %p58
      %p60 = scmp.ne.s32.totalorder %s51, %s52
      %p61 = scmp.eq.s32.totalorder %s20, 0
      %p62 = por %p60, %p61
      %p63 = scmp.ne.s32.totalorder %s51, %s52
      %p64 = scmp.eq.s32.totalorder %s21, 1
      %p65 = por %p63, %p64
      %p67 = scmp.ne.s32.totalorder %s52, %s66
      %p68 = scmp.eq.s32.totalorder %s21, 0
      %p69 = por %p67, %p68
      %s71 = sadd.s32 %s70, 1
      %p74 = scmp.eq.s32.totalorder %s15, 1
      %p75 = scmp.ne.s32.totalorder %s70, %s72
      %p76 = scmp.eq.s32.totalorder %s15, 0
      %p77 = por %p75, %p76
      %p78 = scmp.ne.s32.totalorder %s70, %s72
      %p79 = scmp.eq.s32.totalorder %s20, 1
      %p80 = por %p78, %p79
      %p81 = scmp.ne.s32.totalorder %s72, %s73
      %p82 = scmp.eq.s32.totalorder %s20, 0
      %p83 = por %p81, %p82
      %p84 = scmp.ne.s32.totalorder %s72, %s73
      %p85 = scmp.eq.s32.totalorder %s21, 1
      %p86 = por %p84, %p85
      %p88 = scmp.ne.s32.totalorder %s73, %s87
      %p89 = scmp.eq.s32.totalorder %s21, 0
      %p90 = por %p88, %p89
      %s92 = sadd.s32 %s91, 1
      %p95 = scmp.eq.s32.totalorder %s15, 1
      %p96 = scmp.ne.s32.totalorder %s91, %s93
      %p97 = scmp.eq.s32.totalorder %s15, 0
      %p98 = por %p96, %p97
      %p99 = scmp.ne.s32.totalorder %s91, %s93
      %p100 = scmp.eq.s32.totalorder %s20, 1
      %p101 = por %p99, %p100
      %p102 = scmp.ne.s32.totalorder %s93, %s94
      %p103 = scmp.eq.s32.totalorder %s20, 0
      %p104 = por %p102, %p103
      %p105 = scmp.ne.s32.totalorder %s93, %s94
      %p106 = scmp.eq.s32.totalorder %s21, 1
      %p107 = por %p105, %p106
      %p109 = scmp.ne.s32.totalorder %s94, %s108
      %p110 = scmp.eq.s32.totalorder %s21, 0
      %p111 = por %p109, %p110
      %s113 = sadd.s32 %s112, 1
      %p116 = scmp.eq.s32.totalorder %s15, 1
      %p117 = scmp.ne.s32.totalorder %s112, %s114
      %p118 = scmp.eq.s32.totalorder %s15, 0
      %p119 = por %p117, %p118
      %p120 = scmp.ne.s32.totalorder %s112, %s114
      %p121 = scmp.eq.s32.totalorder %s20, 1
      %p122 = por %p120, %p121
      %p123 = scmp.ne.s32.totalorder %s114, %s115
      %p124 = scmp.eq.s32.totalorder %s20, 0
      %p125 = por %p123, %p124
      %p126 = scmp.ne.s32.totalorder %s114, %s115
      %p127 = scmp.eq.s32.totalorder %s21, 1
      %p128 = por %p126, %p127
      %p130 = scmp.ne.s32.totalorder %s115, %s129
      %p131 = scmp.eq.s32.totalorder %s21, 0
      %p132 = por %p130, %p131
      %s134 = sadd.s32 %s133, 1
      %p137 = scmp.eq.s32.totalorder %s15, 1
      %p138 = scmp.ne.s32.totalorder %s133, %s135
      %p139 = scmp.eq.s32.totalorder %s15, 0
      %p140 = por %p138, %p139
      %p141 = scmp.ne.s32.totalorder %s133, %s135
      %p142 = scmp.eq.s32.totalorder %s20, 1
      %p143 = por %p141, %p142
      %p144 = scmp.ne.s32.totalorder %s135, %s136
      %p145 = scmp.eq.s32.totalorder %s20, 0
      %p146 = por %p144, %p145
      %p147 = scmp.ne.s32.totalorder %s135, %s136
      %p148 = scmp.eq.s32.totalorder %s21, 1
      %p149 = por %p147, %p148
      %p151 = scmp.ne.s32.totalorder %s136, %s150
      %p152 = scmp.eq.s32.totalorder %s21, 0
      %p153 = por %p151, %p152
      %s154 = ssub.s32 %s15, %s22
      %p155 = scmp.eq.s32.totalorder %s154, 0
      %s157 = sadd.s32 %s156, 1
      %s158 = scalar_select %p155, %s156, %s157
      %p161 = pneg %p155
      %p162 = scmp.eq.s32.totalorder %s15, 1
      %p163 = por %p161, %p162
      %p164 = scmp.ne.s32.totalorder %s156, %s159
      %p165 = scmp.eq.s32.totalorder %s15, 0
      %p166 = por %p164, %p165
      %p167 = scmp.ne.s32.totalorder %s156, %s159
      %p168 = scmp.eq.s32.totalorder %s20, 1
      %p169 = por %p167, %p168
      %p170 = scmp.ne.s32.totalorder %s159, %s160
      %p171 = scmp.eq.s32.totalorder %s20, 0
      %p172 = por %p170, %p171
      %p173 = scmp.ne.s32.totalorder %s159, %s160
      %p174 = scmp.eq.s32.totalorder %s21, 1
      %p175 = por %p173, %p174
      %p177 = scmp.ne.s32.totalorder %s160, %s176
      %p178 = scmp.eq.s32.totalorder %s21, 0
      %p179 = por %p177, %p178
      %p180 = scmp.le.s32.totalorder 1, %s15
      %p181 = scmp.lt.s32.totalorder %s15, 3
      %p182 = pnand %p180, %p181
      %p183 = pneg %p182
      // Predicated region
      $region9: #{dense_unit_forward.1} parent=5 // pred_check
        _
      $region10: #{dense_unit_forward.1} parent=5 // pred_check_branch
        %185 = sbr.rel (%p182) target = $region12
      $region11: #{dense_unit_forward.1} parent=5 // pred_region
        %s186 = ssub.s32 %s15, 1
        // Predicated region
        $region13: #{dense_unit_forward.1} parent=11 // pred_check
          %p187 = pneg %p62
        $region14: #{dense_unit_forward.1} parent=11 // pred_check_branch
          %189 = sbr.rel (%p187) target = $region16
        $region15: #{dense_unit_forward.1} parent=11 // pred_region
          _
        $region16: #{dense_unit_forward.1} parent=11 // pred_fallthru
          _
        // Predicated region
        $region17: #{dense_unit_forward.1} parent=11 // pred_check
          %p190 = pneg %p83
        $region18: #{dense_unit_forward.1} parent=11 // pred_check_branch
          %192 = sbr.rel (%p190) target = $region20
        $region19: #{dense_unit_forward.1} parent=11 // pred_region
          _
        $region20: #{dense_unit_forward.1} parent=11 // pred_fallthru
          _
        // Predicated region
        $region21: #{dense_unit_forward.1} parent=11 // pred_check
          %p193 = pneg %p104
        $region22: #{dense_unit_forward.1} parent=11 // pred_check_branch
          %195 = sbr.rel (%p193) target = $region24
        $region23: #{dense_unit_forward.1} parent=11 // pred_region
          _
        $region24: #{dense_unit_forward.1} parent=11 // pred_fallthru
          _
        // Predicated region
        $region25: #{dense_unit_forward.1} parent=11 // pred_check
          %p196 = pneg %p125
        $region26: #{dense_unit_forward.1} parent=11 // pred_check_branch
          %198 = sbr.rel (%p196) target = $region28
        $region27: #{dense_unit_forward.1} parent=11 // pred_region
          _
        $region28: #{dense_unit_forward.1} parent=11 // pred_fallthru
          _
        // Predicated region
        $region29: #{dense_unit_forward.1} parent=11 // pred_check
          %p199 = pneg %p146
        $region30: #{dense_unit_forward.1} parent=11 // pred_check_branch
          %201 = sbr.rel (%p199) target = $region32
        $region31: #{dense_unit_forward.1} parent=11 // pred_region
          _
        $region32: #{dense_unit_forward.1} parent=11 // pred_fallthru
          _
      $region12: #{dense_unit_forward.1} parent=5 // pred_fallthru
        _
      %p202 = scmp.lt.s32.totalorder %s15, 2
      // Predicated region
      $region33: #{dense_unit_forward.1} parent=5 // pred_check
        %p203 = pneg %p202
      $region34: #{dense_unit_forward.1} parent=5 // pred_check_branch
        %205 = sbr.rel (%p203) target = $region36
      $region35: #{dense_unit_forward.1} parent=5 // pred_region
        // Predicated region
        $region37: #{dense_unit_forward.1} parent=35 // pred_check
          %p206 = pneg %p35
        $region38: #{dense_unit_forward.1} parent=35 // pred_check_branch
          %208 = sbr.rel (%p206) target = $region40
        $region39: #{dense_unit_forward.1} parent=35 // pred_region
          %p209 = scmp.lt.s32.totalorder %s15, 1
          %s210 = scalar_select %p209, %s15, 1
          %s211 = smul.addr %s210, 32
          %s212 = smul.addr %s211, 8
          %s213 = scalar_lea.vmem %s0, %s212
        $region40: #{dense_unit_forward.1} parent=35 // pred_fallthru
          _
      $region36: #{dense_unit_forward.1} parent=5 // pred_fallthru
        _
      %p214 = scmp.le.s32.totalorder 1, %s15
      %p215 = scmp.lt.s32.totalorder %s15, 3
      %p216 = pnand %p214, %p215
      %p217 = pneg %p216
      // Predicated region
      $region41: #{dense_unit_forward.1} parent=5 // pred_check
        _
      $region42: #{dense_unit_forward.1} parent=5 // pred_check_branch
        %219 = sbr.rel (%p216) target = $region44
      $region43: #{dense_unit_forward.1} parent=5 // pred_region
        %s220 = ssub.s32 %s15, 1
        %p221 = scmp.lt.s32.totalorder %s20, 1
        %s222 = scalar_select %p221, %s20, 1
        %s223 = smul.addr %s222, 32
        %s224 = smul.addr %s223, 8
        %s225 = scalar_lea.vmem %s0, %s224
        %p226 = pneg %p41
        %p227 = pneg %p38
        %p228 = pneg %p62
        %p229 = pneg %p59
        %p230 = pneg %p83
        %p231 = pneg %p80
        %p232 = pneg %p104
        %p233 = pneg %p101
        %p234 = pneg %p125
        %p235 = pneg %p122
        %p236 = pneg %p146
        %p237 = pneg %p143
        %p238 = pneg %p172
        %p239 = pneg %p169
        %s240 = sand.u32 %s159, 1
        %s241 = scalar_lea.sflag [#allocation3], %s240
        %s242 = sand.u32 %s159, 1
        %s243 = smul.addr %s242, 256
        %s244 = scalar_lea.vmem [#allocation2], %s243
        %p245 = scmp.lt.s32.totalorder %s20, 1
        %s246 = scalar_select %p245, %s20, 1
        %s247 = smul.addr %s246, 32
        %s248 = smul.addr %s247, 8
        %s249 = scalar_lea.vmem %s0, %s248
        %v251 = vld [vmem:[%s249] sm:$0xff]
        %v252 = vld [vmem:[%s249 + $0x8] sm:$0xff]
        %v253 = vld [vmem:[%s249 + $0x10] sm:$0xff]
        %v254 = vld [vmem:[%s249 + $0x18] sm:$0xff]
        %v255 = vld [vmem:[%s249 + $0x20] sm:$0xff]
        %v256 = vld [vmem:[%s249 + $0x28] sm:$0xff]
        %v257 = vld [vmem:[%s249 + $0x30] sm:$0xff]
        %v258 = vld [vmem:[%s249 + $0x38] sm:$0xff]
        %v259 = vld [vmem:[%s249 + $0x40] sm:$0xff]
        %v260 = vld [vmem:[%s249 + $0x48] sm:$0xff]
        %v261 = vld [vmem:[%s249 + $0x50] sm:$0xff]
        %v262 = vld [vmem:[%s249 + $0x58] sm:$0xff]
        %v263 = vld [vmem:[%s249 + $0x60] sm:$0xff]
        %v264 = vld [vmem:[%s249 + $0x68] sm:$0xff]
        %v265 = vld [vmem:[%s249 + $0x70] sm:$0xff]
        %v266 = vld [vmem:[%s249 + $0x78] sm:$0xff]
        %v267 = vld [vmem:[%s249 + $0x80] sm:$0xff]
        %v268 = vld [vmem:[%s249 + $0x88] sm:$0xff]
        %v269 = vld [vmem:[%s249 + $0x90] sm:$0xff]
        %v270 = vld [vmem:[%s249 + $0x98] sm:$0xff]
        %v271 = vld [vmem:[%s249 + $0xa0] sm:$0xff]
        %v272 = vld [vmem:[%s249 + $0xa8] sm:$0xff]
        %v273 = vld [vmem:[%s249 + $0xb0] sm:$0xff]
        %v274 = vld [vmem:[%s249 + $0xb8] sm:$0xff]
        %v275 = vld [vmem:[%s249 + $0xc0] sm:$0xff]
        %v276 = vld [vmem:[%s249 + $0xc8] sm:$0xff]
        %v277 = vld [vmem:[%s249 + $0xd0] sm:$0xff]
        %v278 = vld [vmem:[%s249 + $0xd8] sm:$0xff]
        %v279 = vld [vmem:[%s249 + $0xe0] sm:$0xff]
        %v280 = vld [vmem:[%s249 + $0xe8] sm:$0xff]
        %v281 = vld [vmem:[%s249 + $0xf0] sm:$0xff]
        %v282 = vld [vmem:[%s249 + $0xf8] sm:$0xff]
        %v283 = vld [vmem:[%s1] sm:$0x1]
        %v285 = vlaneseq
        %v286 = vshrl.u32 %v285, 7
        %v287 = vsub.s32 0, %v286
        %v288 = vrot.slane %v283, %v287
        %v290 = vmul.f32 %v251, %v288
        %v291 = vmul.f32 %v252, %v288
        %v292 = vmul.f32 %v253, %v288
        %v293 = vmul.f32 %v254, %v288
        %v294 = vmul.f32 %v255, %v288
        %v295 = vmul.f32 %v256, %v288
        %v296 = vmul.f32 %v257, %v288
        %v297 = vmul.f32 %v258, %v288
        %v298 = vmul.f32 %v259, %v288
        %v299 = vmul.f32 %v260, %v288
        %v300 = vmul.f32 %v261, %v288
        %v301 = vmul.f32 %v262, %v288
        %v302 = vmul.f32 %v263, %v288
        %v303 = vmul.f32 %v264, %v288
        %v304 = vmul.f32 %v265, %v288
        %v305 = vmul.f32 %v266, %v288
        %v306 = vmul.f32 %v267, %v288
        %v307 = vmul.f32 %v268, %v288
        %v308 = vmul.f32 %v269, %v288
        %v309 = vmul.f32 %v270, %v288
        %v310 = vmul.f32 %v271, %v288
        %v311 = vmul.f32 %v272, %v288
        %v312 = vmul.f32 %v273, %v288
        %v313 = vmul.f32 %v274, %v288
        %v314 = vmul.f32 %v275, %v288
        %v315 = vmul.f32 %v276, %v288
        %v316 = vmul.f32 %v277, %v288
        %v317 = vmul.f32 %v278, %v288
        %v318 = vmul.f32 %v279, %v288
        %v319 = vmul.f32 %v280, %v288
        %v320 = vmul.f32 %v281, %v288
        %v321 = vmul.f32 %v282, %v288
        %v322 = vld [vmem:[%s2] sm:$0x1]
        %v324 = vlaneseq
        %v325 = vshrl.u32 %v324, 7
        %v326 = vsub.s32 0, %v325
        %v327 = vrot.slane %v322, %v326
        %v329 = vadd.f32 %v290, %v327
        %v330 = vadd.f32 %v291, %v327
        %v331 = vadd.f32 %v292, %v327
        %v332 = vadd.f32 %v293, %v327
        %v333 = vadd.f32 %v294, %v327
        %v334 = vadd.f32 %v295, %v327
        %v335 = vadd.f32 %v296, %v327
        %v336 = vadd.f32 %v297, %v327
        %v337 = vadd.f32 %v298, %v327
        %v338 = vadd.f32 %v299, %v327
        %v339 = vadd.f32 %v300, %v327
        %v340 = vadd.f32 %v301, %v327
        %v341 = vadd.f32 %v302, %v327
        %v342 = vadd.f32 %v303, %v327
        %v343 = vadd.f32 %v304, %v327
        %v344 = vadd.f32 %v305, %v327
        %v345 = vadd.f32 %v306, %v327
        %v346 = vadd.f32 %v307, %v327
        %v347 = vadd.f32 %v308, %v327
        %v348 = vadd.f32 %v309, %v327
        %v349 = vadd.f32 %v310, %v327
        %v350 = vadd.f32 %v311, %v327
        %v351 = vadd.f32 %v312, %v327
        %v352 = vadd.f32 %v313, %v327
        %v353 = vadd.f32 %v314, %v327
        %v354 = vadd.f32 %v315, %v327
        %v355 = vadd.f32 %v316, %v327
        %v356 = vadd.f32 %v317, %v327
        %v357 = vadd.f32 %v318, %v327
        %v358 = vadd.f32 %v319, %v327
        %v359 = vadd.f32 %v320, %v327
        %v360 = vadd.f32 %v321, %v327
        %v361 = vmax.f32 %v329, 0.0
        %v362 = vmax.f32 %v330, 0.0
        %v363 = vmax.f32 %v331, 0.0
        %v364 = vmax.f32 %v332, 0.0
        %v365 = vmax.f32 %v333, 0.0
        %v366 = vmax.f32 %v334, 0.0
        %v367 = vmax.f32 %v335, 0.0
        %v368 = vmax.f32 %v336, 0.0
        %v369 = vmax.f32 %v337, 0.0
        %v370 = vmax.f32 %v338, 0.0
        %v371 = vmax.f32 %v339, 0.0
        %v372 = vmax.f32 %v340, 0.0
        %v373 = vmax.f32 %v341, 0.0
        %v374 = vmax.f32 %v342, 0.0
        %v375 = vmax.f32 %v343, 0.0
        %v376 = vmax.f32 %v344, 0.0
        %v377 = vmax.f32 %v345, 0.0
        %v378 = vmax.f32 %v346, 0.0
        %v379 = vmax.f32 %v347, 0.0
        %v380 = vmax.f32 %v348, 0.0
        %v381 = vmax.f32 %v349, 0.0
        %v382 = vmax.f32 %v350, 0.0
        %v383 = vmax.f32 %v351, 0.0
        %v384 = vmax.f32 %v352, 0.0
        %v385 = vmax.f32 %v353, 0.0
        %v386 = vmax.f32 %v354, 0.0
        %v387 = vmax.f32 %v355, 0.0
        %v388 = vmax.f32 %v356, 0.0
        %v389 = vmax.f32 %v357, 0.0
        %v390 = vmax.f32 %v358, 0.0
        %v391 = vmax.f32 %v359, 0.0
        %v392 = vmax.f32 %v360, 0.0
        %v393 = vpack.c.bf16 %v362, %v361
        %v394 = vpack.c.bf16 %v364, %v363
        %v395 = vpack.c.bf16 %v366, %v365
        %v396 = vpack.c.bf16 %v368, %v367
        %v397 = vpack.c.bf16 %v370, %v369
        %v398 = vpack.c.bf16 %v372, %v371
        %v399 = vpack.c.bf16 %v374, %v373
        %v400 = vpack.c.bf16 %v376, %v375
        %v401 = vpack.c.bf16 %v378, %v377
        %v402 = vpack.c.bf16 %v380, %v379
        %v403 = vpack.c.bf16 %v382, %v381
        %v404 = vpack.c.bf16 %v384, %v383
        %v405 = vpack.c.bf16 %v386, %v385
        %v406 = vpack.c.bf16 %v388, %v387
        %v407 = vpack.c.bf16 %v390, %v389
        %v408 = vpack.c.bf16 %v392, %v391
        %v409 = vld [vmem:[%s3] sm:$0xf]
        %v410 = vld [vmem:[%s3 + $0x4] sm:$0xf]
        %v411 = vld [vmem:[%s4] sm:$0x1]
        %v413 = vlaneseq
        %v414 = vshrl.u32 %v413, 7
        %v415 = vsub.s32 0, %v414
        %v416 = vrot.slane %v411, %v415
        %v420 = vunpack.c.l.b16 %v409
        %v421 = vunpack.c.l.b16 %v410
        %v422 = vpack.c.b16 %v421, %v420
        %vm424 = vcmask 130048
        %v426 = vsel %vm424, %v393, 0
        %v429 = vsel %vm424, %v394, 0
        %v432 = vsel %vm424, %v395, 0
        %v435 = vsel %vm424, %v396, 0
        %v438 = vsel %vm424, %v397, 0
        %v441 = vsel %vm424, %v398, 0
        %v444 = vsel %vm424, %v399, 0
        %v447 = vsel %vm424, %v400, 0
        %v450 = vsel %vm424, %v401, 0
        %v453 = vsel %vm424, %v402, 0
        %v456 = vsel %vm424, %v403, 0
        %v459 = vsel %vm424, %v404, 0
        %v462 = vsel %vm424, %v405, 0
        %v465 = vsel %vm424, %v406, 0
        %v468 = vsel %vm424, %v407, 0
        %v471 = vsel %vm424, %v408, 0
        %473 = vmatprep.subr.bf16.mxu0 0
        %474 = vmatpush1.bf16.msra.mxu0 0
        %475 = vmatprep.subr.bf16.mxu0 0
        %476 = vmatpush1.bf16.msra.mxu0 0
        %477 = vmatprep.subr.bf16.mxu0 0
        %478 = vmatpush1.bf16.msra.mxu0 0
        %479 = vmatprep.subr.bf16.mxu0 0
        %480 = vmatpush1.bf16.msra.mxu0 0
        %481 = vmatprep.subr.bf16.mxu0 0
        %482 = vmatpush1.bf16.msra.mxu0 0
        %483 = vmatprep.subr.bf16.mxu0 0
        %484 = vmatpush1.bf16.msra.mxu0 0
        %485 = vmatprep.subr.bf16.mxu0 0
        %486 = vmatpush1.bf16.msra.mxu0 0
        %487 = vmatprep.subr.bf16.mxu0 0
        %488 = vmatpush1.bf16.msra.mxu0 %v422
        %489 = vmatprep.subr.bf16.mxu0 0
        %490 = vmatpush2.bf16.msra.mxu0 0
        %491 = vmatprep.subr.bf16.mxu0 0
        %492 = vmatpush2.bf16.msra.mxu0 0
        %493 = vmatprep.subr.bf16.mxu0 0
        %494 = vmatpush2.bf16.msra.mxu0 0
        %495 = vmatprep.subr.bf16.mxu0 0
        %496 = vmatpush2.bf16.msra.mxu0 0
        %497 = vmatprep.subr.bf16.mxu0 0
        %498 = vmatpush2.bf16.msra.mxu0 0
        %499 = vmatprep.subr.bf16.mxu0 0
        %500 = vmatpush2.bf16.msra.mxu0 0
        %501 = vmatprep.subr.bf16.mxu0 0
        %502 = vmatpush2.bf16.msra.mxu0 0
        %503 = vmatprep.subr.bf16.mxu0 0
        %504 = vmatpush2.bf16.msra.mxu0 0
        %505 = vmatprep.mubr.bf16.mxu0 0
        %506 = vmatmul.mubr.bf16.gmra.mxu0 %v426
        %v507 = vpop.f32.mrf.mxu0
        %v508 = vadd.f32 %v416, %v507
        %v509 = vpop.f32.mrf.mxu0
        %v510 = vpop.f32.mrf.mxu0
        %v511 = vadd.f32 %v416, %v510
        %v512 = vpop.f32.mrf.mxu0
        %513 = vmatprep.mubr.bf16.mxu0 0
        %514 = vmatmul.mubr.bf16.gmra.mxu0 %v429
        %v515 = vpop.f32.mrf.mxu0
        %v516 = vadd.f32 %v416, %v515
        %v517 = vpop.f32.mrf.mxu0
        %v518 = vpop.f32.mrf.mxu0
        %v519 = vadd.f32 %v416, %v518
        %v520 = vpop.f32.mrf.mxu0
        %521 = vmatprep.mubr.bf16.mxu0 0
        %522 = vmatmul.mubr.bf16.gmra.mxu0 %v432
        %v523 = vpop.f32.mrf.mxu0
        %v524 = vadd.f32 %v416, %v523
        %v525 = vpop.f32.mrf.mxu0
        %v526 = vpop.f32.mrf.mxu0
        %v527 = vadd.f32 %v416, %v526
        %v528 = vpop.f32.mrf.mxu0
        %529 = vmatprep.mubr.bf16.mxu0 0
        %530 = vmatmul.mubr.bf16.gmra.mxu0 %v435
        %v531 = vpop.f32.mrf.mxu0
        %v532 = vadd.f32 %v416, %v531
        %v533 = vpop.f32.mrf.mxu0
        %v534 = vpop.f32.mrf.mxu0
        %v535 = vadd.f32 %v416, %v534
        %v536 = vpop.f32.mrf.mxu0
        %537 = vmatprep.mubr.bf16.mxu0 0
        %538 = vmatmul.mubr.bf16.gmra.mxu0 %v438
        %v539 = vpop.f32.mrf.mxu0
        %v540 = vadd.f32 %v416, %v539
        %v541 = vpop.f32.mrf.mxu0
        %v542 = vpop.f32.mrf.mxu0
        %v543 = vadd.f32 %v416, %v542
        %v544 = vpop.f32.mrf.mxu0
        %545 = vmatprep.mubr.bf16.mxu0 0
        %546 = vmatmul.mubr.bf16.gmra.mxu0 %v441
        %v547 = vpop.f32.mrf.mxu0
        %v548 = vadd.f32 %v416, %v547
        %v549 = vpop.f32.mrf.mxu0
        %v550 = vpop.f32.mrf.mxu0
        %v551 = vadd.f32 %v416, %v550
        %v552 = vpop.f32.mrf.mxu0
        %553 = vmatprep.mubr.bf16.mxu0 0
        %554 = vmatmul.mubr.bf16.gmra.mxu0 %v444
        %v555 = vpop.f32.mrf.mxu0
        %v556 = vadd.f32 %v416, %v555
        %v557 = vpop.f32.mrf.mxu0
        %v558 = vpop.f32.mrf.mxu0
        %v559 = vadd.f32 %v416, %v558
        %v560 = vpop.f32.mrf.mxu0
        %561 = vmatprep.mubr.bf16.mxu0 0
        %562 = vmatmul.mubr.bf16.gmra.mxu0 %v447
        %v563 = vpop.f32.mrf.mxu0
        %v564 = vadd.f32 %v416, %v563
        %v565 = vpop.f32.mrf.mxu0
        %v566 = vpop.f32.mrf.mxu0
        %v567 = vadd.f32 %v416, %v566
        %v568 = vpop.f32.mrf.mxu0
        %569 = vmatprep.mubr.bf16.mxu0 0
        %570 = vmatmul.mubr.bf16.gmra.mxu0 %v450
        %v571 = vpop.f32.mrf.mxu0
        %v572 = vadd.f32 %v416, %v571
        %v573 = vpop.f32.mrf.mxu0
        %v574 = vpop.f32.mrf.mxu0
        %v575 = vadd.f32 %v416, %v574
        %v576 = vpop.f32.mrf.mxu0
        %577 = vmatprep.mubr.bf16.mxu0 0
        %578 = vmatmul.mubr.bf16.gmra.mxu0 %v453
        %v579 = vpop.f32.mrf.mxu0
        %v580 = vadd.f32 %v416, %v579
        %v581 = vpop.f32.mrf.mxu0
        %v582 = vpop.f32.mrf.mxu0
        %v583 = vadd.f32 %v416, %v582
        %v584 = vpop.f32.mrf.mxu0
        %585 = vmatprep.mubr.bf16.mxu0 0
        %586 = vmatmul.mubr.bf16.gmra.mxu0 %v456
        %v587 = vpop.f32.mrf.mxu0
        %v588 = vadd.f32 %v416, %v587
        %v589 = vpop.f32.mrf.mxu0
        %v590 = vpop.f32.mrf.mxu0
        %v591 = vadd.f32 %v416, %v590
        %v592 = vpop.f32.mrf.mxu0
        %593 = vmatprep.mubr.bf16.mxu0 0
        %594 = vmatmul.mubr.bf16.gmra.mxu0 %v459
        %v595 = vpop.f32.mrf.mxu0
        %v596 = vadd.f32 %v416, %v595
        %v597 = vpop.f32.mrf.mxu0
        %v598 = vpop.f32.mrf.mxu0
        %v599 = vadd.f32 %v416, %v598
        %v600 = vpop.f32.mrf.mxu0
        %601 = vmatprep.mubr.bf16.mxu0 0
        %602 = vmatmul.mubr.bf16.gmra.mxu0 %v462
        %v603 = vpop.f32.mrf.mxu0
        %v604 = vadd.f32 %v416, %v603
        %v605 = vpop.f32.mrf.mxu0
        %v606 = vpop.f32.mrf.mxu0
        %v607 = vadd.f32 %v416, %v606
        %v608 = vpop.f32.mrf.mxu0
        %609 = vmatprep.mubr.bf16.mxu0 0
        %610 = vmatmul.mubr.bf16.gmra.mxu0 %v465
        %v611 = vpop.f32.mrf.mxu0
        %v612 = vadd.f32 %v416, %v611
        %v613 = vpop.f32.mrf.mxu0
        %v614 = vpop.f32.mrf.mxu0
        %v615 = vadd.f32 %v416, %v614
        %v616 = vpop.f32.mrf.mxu0
        %617 = vmatprep.mubr.bf16.mxu0 0
        %618 = vmatmul.mubr.bf16.gmra.mxu0 %v468
        %v619 = vpop.f32.mrf.mxu0
        %v620 = vadd.f32 %v416, %v619
        %v621 = vpop.f32.mrf.mxu0
        %v622 = vpop.f32.mrf.mxu0
        %v623 = vadd.f32 %v416, %v622
        %v624 = vpop.f32.mrf.mxu0
        %625 = vmatprep.mubr.bf16.mxu0 0
        %626 = vmatmul.mubr.bf16.gmra.mxu0 %v471
        %v627 = vpop.f32.mrf.mxu0
        %v628 = vadd.f32 %v416, %v627
        %v629 = vpop.f32.mrf.mxu0
        %v630 = vpop.f32.mrf.mxu0
        %v631 = vadd.f32 %v416, %v630
        %v632 = vpop.f32.mrf.mxu0
        %633 = vdwg.mxu0
        %v634 = vmax.f32 %v508, 0.0
        %v635 = vmax.f32 %v511, 0.0
        %v636 = vmax.f32 %v516, 0.0
        %v637 = vmax.f32 %v519, 0.0
        %v638 = vmax.f32 %v524, 0.0
        %v639 = vmax.f32 %v527, 0.0
        %v640 = vmax.f32 %v532, 0.0
        %v641 = vmax.f32 %v535, 0.0
        %v642 = vmax.f32 %v540, 0.0
        %v643 = vmax.f32 %v543, 0.0
        %v644 = vmax.f32 %v548, 0.0
        %v645 = vmax.f32 %v551, 0.0
        %v646 = vmax.f32 %v556, 0.0
        %v647 = vmax.f32 %v559, 0.0
        %v648 = vmax.f32 %v564, 0.0
        %v649 = vmax.f32 %v567, 0.0
        %v650 = vmax.f32 %v572, 0.0
        %v651 = vmax.f32 %v575, 0.0
        %v652 = vmax.f32 %v580, 0.0
        %v653 = vmax.f32 %v583, 0.0
        %v654 = vmax.f32 %v588, 0.0
        %v655 = vmax.f32 %v591, 0.0
        %v656 = vmax.f32 %v596, 0.0
        %v657 = vmax.f32 %v599, 0.0
        %v658 = vmax.f32 %v604, 0.0
        %v659 = vmax.f32 %v607, 0.0
        %v660 = vmax.f32 %v612, 0.0
        %v661 = vmax.f32 %v615, 0.0
        %v662 = vmax.f32 %v620, 0.0
        %v663 = vmax.f32 %v623, 0.0
        %v664 = vmax.f32 %v628, 0.0
        %v665 = vmax.f32 %v631, 0.0
        %vm699 = vcmask 1040384
        %v700 = vrot.slane 0.0, 7
        %v701 = vsel %vm699, %v700, %v700
        %v702 = vrot.slane %v634, 7
        %v703 = vrot.slane %v635, 7
        %v704 = vsel %vm699, %v702, %v703
        %v705 = vrot.slane %v636, 7
        %v706 = vrot.slane %v637, 7
        %v707 = vsel %vm699, %v705, %v706
        %v708 = vrot.slane %v638, 7
        %v709 = vrot.slane %v639, 7
        %v710 = vsel %vm699, %v708, %v709
        %v711 = vrot.slane %v640, 7
        %v712 = vrot.slane %v641, 7
        %v713 = vsel %vm699, %v711, %v712
        %v714 = vrot.slane %v642, 7
        %v715 = vrot.slane %v643, 7
        %v716 = vsel %vm699, %v714, %v715
        %v717 = vrot.slane %v644, 7
        %v718 = vrot.slane %v645, 7
        %v719 = vsel %vm699, %v717, %v718
        %v720 = vrot.slane %v646, 7
        %v721 = vrot.slane %v647, 7
        %v722 = vsel %vm699, %v720, %v721
        %v723 = vrot.slane %v648, 7
        %v724 = vrot.slane %v649, 7
        %v725 = vsel %vm699, %v723, %v724
        %v726 = vrot.slane %v650, 7
        %v727 = vrot.slane %v651, 7
        %v728 = vsel %vm699, %v726, %v727
        %v729 = vrot.slane %v652, 7
        %v730 = vrot.slane %v653, 7
        %v731 = vsel %vm699, %v729, %v730
        %v732 = vrot.slane %v654, 7
        %v733 = vrot.slane %v655, 7
        %v734 = vsel %vm699, %v732, %v733
        %v735 = vrot.slane %v656, 7
        %v736 = vrot.slane %v657, 7
        %v737 = vsel %vm699, %v735, %v736
        %v738 = vrot.slane %v658, 7
        %v739 = vrot.slane %v659, 7
        %v740 = vsel %vm699, %v738, %v739
        %v741 = vrot.slane %v660, 7
        %v742 = vrot.slane %v661, 7
        %v743 = vsel %vm699, %v741, %v742
        %v744 = vrot.slane %v662, 7
        %v745 = vrot.slane %v663, 7
        %v746 = vsel %vm699, %v744, %v745
        %v747 = vrot.slane %v664, 7
        %v748 = vrot.slane %v665, 7
        %v749 = vsel %vm699, %v747, %v748
        %v799 = vsel %vm699, 0.0, %v700
        %v800 = vsel %vm699, 0.0, %v702
        %v801 = vsel %vm699, 0.0, %v705
        %v802 = vsel %vm699, 0.0, %v708
        %v803 = vsel %vm699, 0.0, %v711
        %v804 = vsel %vm699, 0.0, %v714
        %v805 = vsel %vm699, 0.0, %v717
        %v806 = vsel %vm699, 0.0, %v720
        %v807 = vsel %vm699, 0.0, %v723
        %v808 = vsel %vm699, 0.0, %v726
        %v809 = vsel %vm699, 0.0, %v729
        %v810 = vsel %vm699, 0.0, %v732
        %v811 = vsel %vm699, 0.0, %v735
        %v812 = vsel %vm699, 0.0, %v738
        %v813 = vsel %vm699, 0.0, %v741
        %v814 = vsel %vm699, 0.0, %v744
        %v815 = vsel %vm699, 0.0, %v747
        %v816 = vsel %vm699, %v700, 0.0
        %v817 = vsel %vm699, %v703, 0.0
        %v818 = vsel %vm699, %v706, 0.0
        %v819 = vsel %vm699, %v709, 0.0
        %v820 = vsel %vm699, %v712, 0.0
        %v821 = vsel %vm699, %v715, 0.0
        %v822 = vsel %vm699, %v718, 0.0
        %v823 = vsel %vm699, %v721, 0.0
        %v824 = vsel %vm699, %v724, 0.0
        %v825 = vsel %vm699, %v727, 0.0
        %v826 = vsel %vm699, %v730, 0.0
        %v827 = vsel %vm699, %v733, 0.0
        %v828 = vsel %vm699, %v736, 0.0
        %v829 = vsel %vm699, %v739, 0.0
        %v830 = vsel %vm699, %v742, 0.0
        %v831 = vsel %vm699, %v745, 0.0
        %v832 = vsel %vm699, %v748, 0.0
        %vm865 = vcmask 1046528
        %v866 = vrot.slane %v799, 1
        %v867 = vrot.slane %v701, 1
        %v868 = vsel %vm865, %v866, %v867
        %v869 = vrot.slane %v816, 1
        %v870 = vsel %vm865, %v867, %v869
        %v871 = vrot.slane %v800, 1
        %v872 = vrot.slane %v704, 1
        %v873 = vsel %vm865, %v871, %v872
        %v874 = vrot.slane %v817, 1
        %v875 = vsel %vm865, %v872, %v874
        %v876 = vrot.slane %v801, 1
        %v877 = vrot.slane %v707, 1
        %v878 = vsel %vm865, %v876, %v877
        %v879 = vrot.slane %v818, 1
        %v880 = vsel %vm865, %v877, %v879
        %v881 = vrot.slane %v802, 1
        %v882 = vrot.slane %v710, 1
        %v883 = vsel %vm865, %v881, %v882
        %v884 = vrot.slane %v819, 1
        %v885 = vsel %vm865, %v882, %v884
        %v886 = vrot.slane %v803, 1
        %v887 = vrot.slane %v713, 1
        %v888 = vsel %vm865, %v886, %v887
        %v889 = vrot.slane %v820, 1
        %v890 = vsel %vm865, %v887, %v889
        %v891 = vrot.slane %v804, 1
        %v892 = vrot.slane %v716, 1
        %v893 = vsel %vm865, %v891, %v892
        %v894 = vrot.slane %v821, 1
        %v895 = vsel %vm865, %v892, %v894
        %v896 = vrot.slane %v805, 1
        %v897 = vrot.slane %v719, 1
        %v898 = vsel %vm865, %v896, %v897
        %v899 = vrot.slane %v822, 1
        %v900 = vsel %vm865, %v897, %v899
        %v901 = vrot.slane %v806, 1
        %v902 = vrot.slane %v722, 1
        %v903 = vsel %vm865, %v901, %v902
        %v904 = vrot.slane %v823, 1
        %v905 = vsel %vm865, %v902, %v904
        %v906 = vrot.slane %v807, 1
        %v907 = vrot.slane %v725, 1
        %v908 = vsel %vm865, %v906, %v907
        %v909 = vrot.slane %v824, 1
        %v910 = vsel %vm865, %v907, %v909
        %v911 = vrot.slane %v808, 1
        %v912 = vrot.slane %v728, 1
        %v913 = vsel %vm865, %v911, %v912
        %v914 = vrot.slane %v825, 1
        %v915 = vsel %vm865, %v912, %v914
        %v916 = vrot.slane %v809, 1
        %v917 = vrot.slane %v731, 1
        %v918 = vsel %vm865, %v916, %v917
        %v919 = vrot.slane %v826, 1
        %v920 = vsel %vm865, %v917, %v919
        %v921 = vrot.slane %v810, 1
        %v922 = vrot.slane %v734, 1
        %v923 = vsel %vm865, %v921, %v922
        %v924 = vrot.slane %v827, 1
        %v925 = vsel %vm865, %v922, %v924
        %v926 = vrot.slane %v811, 1
        %v927 = vrot.slane %v737, 1
        %v928 = vsel %vm865, %v926, %v927
        %v929 = vrot.slane %v828, 1
        %v930 = vsel %vm865, %v927, %v929
        %v931 = vrot.slane %v812, 1
        %v932 = vrot.slane %v740, 1
        %v933 = vsel %vm865, %v931, %v932
        %v934 = vrot.slane %v829, 1
        %v935 = vsel %vm865, %v932, %v934
        %v936 = vrot.slane %v813, 1
        %v937 = vrot.slane %v743, 1
        %v938 = vsel %vm865, %v936, %v937
        %v939 = vrot.slane %v830, 1
        %v940 = vsel %vm865, %v937, %v939
        %v941 = vrot.slane %v814, 1
        %v942 = vrot.slane %v746, 1
        %v943 = vsel %vm865, %v941, %v942
        %v944 = vrot.slane %v831, 1
        %v945 = vsel %vm865, %v942, %v944
        %946 = vrot.lane.b32.xlu0 %v868, 32
        %v947 = vpop.permute.xlu0 %946
        %948 = vrot.lane.b32.xlu0 %v870, 32
        %v949 = vpop.permute.xlu0 %948
        %950 = vrot.lane.b32.xlu0 %v873, 32
        %v951 = vpop.permute.xlu0 %950
        %952 = vrot.lane.b32.xlu0 %v875, 32
        %v953 = vpop.permute.xlu0 %952
        %954 = vrot.lane.b32.xlu0 %v878, 32
        %v955 = vpop.permute.xlu0 %954
        %956 = vrot.lane.b32.xlu0 %v880, 32
        %v957 = vpop.permute.xlu0 %956
        %958 = vrot.lane.b32.xlu0 %v883, 32
        %v959 = vpop.permute.xlu0 %958
        %960 = vrot.lane.b32.xlu0 %v885, 32
        %v961 = vpop.permute.xlu0 %960
        %962 = vrot.lane.b32.xlu0 %v888, 32
        %v963 = vpop.permute.xlu0 %962
        %964 = vrot.lane.b32.xlu0 %v890, 32
        %v965 = vpop.permute.xlu0 %964
        %966 = vrot.lane.b32.xlu0 %v893, 32
        %v967 = vpop.permute.xlu0 %966
        %968 = vrot.lane.b32.xlu0 %v895, 32
        %v969 = vpop.permute.xlu0 %968
        %970 = vrot.lane.b32.xlu0 %v898, 32
        %v971 = vpop.permute.xlu0 %970
        %972 = vrot.lane.b32.xlu0 %v900, 32
        %v973 = vpop.permute.xlu0 %972
        %974 = vrot.lane.b32.xlu0 %v903, 32
        %v975 = vpop.permute.xlu0 %974
        %976 = vrot.lane.b32.xlu0 %v905, 32
        %v977 = vpop.permute.xlu0 %976
        %978 = vrot.lane.b32.xlu0 %v908, 32
        %v979 = vpop.permute.xlu0 %978
        %980 = vrot.lane.b32.xlu0 %v910, 32
        %v981 = vpop.permute.xlu0 %980
        %982 = vrot.lane.b32.xlu0 %v913, 32
        %v983 = vpop.permute.xlu0 %982
        %984 = vrot.lane.b32.xlu0 %v915, 32
        %v985 = vpop.permute.xlu0 %984
        %986 = vrot.lane.b32.xlu0 %v918, 32
        %v987 = vpop.permute.xlu0 %986
        %988 = vrot.lane.b32.xlu0 %v920, 32
        %v989 = vpop.permute.xlu0 %988
        %990 = vrot.lane.b32.xlu0 %v923, 32
        %v991 = vpop.permute.xlu0 %990
        %992 = vrot.lane.b32.xlu0 %v925, 32
        %v993 = vpop.permute.xlu0 %992
        %994 = vrot.lane.b32.xlu0 %v928, 32
        %v995 = vpop.permute.xlu0 %994
        %996 = vrot.lane.b32.xlu0 %v930, 32
        %v997 = vpop.permute.xlu0 %996
        %998 = vrot.lane.b32.xlu0 %v933, 32
        %v999 = vpop.permute.xlu0 %998
        %1000 = vrot.lane.b32.xlu0 %v935, 32
        %v1001 = vpop.permute.xlu0 %1000
        %1002 = vrot.lane.b32.xlu0 %v938, 32
        %v1003 = vpop.permute.xlu0 %1002
        %1004 = vrot.lane.b32.xlu0 %v940, 32
        %v1005 = vpop.permute.xlu0 %1004
        %1006 = vrot.lane.b32.xlu0 %v943, 32
        %v1007 = vpop.permute.xlu0 %1006
        %1008 = vrot.lane.b32.xlu0 %v945, 32
        %v1009 = vpop.permute.xlu0 %1008
        %vm1042 = vcmask 1045504
        %v1043 = vrot.slane %v799, 2
        %v1044 = vrot.slane %v701, 2
        %v1045 = vsel %vm1042, %v1043, %v1044
        %v1046 = vrot.slane %v816, 2
        %v1047 = vsel %vm1042, %v1044, %v1046
        %v1048 = vrot.slane %v800, 2
        %v1049 = vrot.slane %v704, 2
        %v1050 = vsel %vm1042, %v1048, %v1049
        %v1051 = vrot.slane %v817, 2
        %v1052 = vsel %vm1042, %v1049, %v1051
        %v1053 = vrot.slane %v801, 2
        %v1054 = vrot.slane %v707, 2
        %v1055 = vsel %vm1042, %v1053, %v1054
        %v1056 = vrot.slane %v818, 2
        %v1057 = vsel %vm1042, %v1054, %v1056
        %v1058 = vrot.slane %v802, 2
        %v1059 = vrot.slane %v710, 2
        %v1060 = vsel %vm1042, %v1058, %v1059
        %v1061 = vrot.slane %v819, 2
        %v1062 = vsel %vm1042, %v1059, %v1061
        %v1063 = vrot.slane %v803, 2
        %v1064 = vrot.slane %v713, 2
        %v1065 = vsel %vm1042, %v1063, %v1064
        %v1066 = vrot.slane %v820, 2
        %v1067 = vsel %vm1042, %v1064, %v1066
        %v1068 = vrot.slane %v804, 2
        %v1069 = vrot.slane %v716, 2
        %v1070 = vsel %vm1042, %v1068, %v1069
        %v1071 = vrot.slane %v821, 2
        %v1072 = vsel %vm1042, %v1069, %v1071
        %v1073 = vrot.slane %v805, 2
        %v1074 = vrot.slane %v719, 2
        %v1075 = vsel %vm1042, %v1073, %v1074
        %v1076 = vrot.slane %v822, 2
        %v1077 = vsel %vm1042, %v1074, %v1076
        %v1078 = vrot.slane %v806, 2
        %v1079 = vrot.slane %v722, 2
        %v1080 = vsel %vm1042, %v1078, %v1079
        %v1081 = vrot.slane %v823, 2
        %v1082 = vsel %vm1042, %v1079, %v1081
        %v1083 = vrot.slane %v807, 2
        %v1084 = vrot.slane %v725, 2
        %v1085 = vsel %vm1042, %v1083, %v1084
        %v1086 = vrot.slane %v824, 2
        %v1087 = vsel %vm1042, %v1084, %v1086
        %v1088 = vrot.slane %v808, 2
        %v1089 = vrot.slane %v728, 2
        %v1090 = vsel %vm1042, %v1088, %v1089
        %v1091 = vrot.slane %v825, 2
        %v1092 = vsel %vm1042, %v1089, %v1091
        %v1093 = vrot.slane %v809, 2
        %v1094 = vrot.slane %v731, 2
        %v1095 = vsel %vm1042, %v1093, %v1094
        %v1096 = vrot.slane %v826, 2
        %v1097 = vsel %vm1042, %v1094, %v1096
        %v1098 = vrot.slane %v810, 2
        %v1099 = vrot.slane %v734, 2
        %v1100 = vsel %vm1042, %v1098, %v1099
        %v1101 = vrot.slane %v827, 2
        %v1102 = vsel %vm1042, %v1099, %v1101
        %v1103 = vrot.slane %v811, 2
        %v1104 = vrot.slane %v737, 2
        %v1105 = vsel %vm1042, %v1103, %v1104
        %v1106 = vrot.slane %v828, 2
        %v1107 = vsel %vm1042, %v1104, %v1106
        %v1108 = vrot.slane %v812, 2
        %v1109 = vrot.slane %v740, 2
        %v1110 = vsel %vm1042, %v1108, %v1109
        %v1111 = vrot.slane %v829, 2
        %v1112 = vsel %vm1042, %v1109, %v1111
        %v1113 = vrot.slane %v813, 2
        %v1114 = vrot.slane %v743, 2
        %v1115 = vsel %vm1042, %v1113, %v1114
        %v1116 = vrot.slane %v830, 2
        %v1117 = vsel %vm1042, %v1114, %v1116
        %v1118 = vrot.slane %v814, 2
        %v1119 = vrot.slane %v746, 2
        %v1120 = vsel %vm1042, %v1118, %v1119
        %v1121 = vrot.slane %v831, 2
        %v1122 = vsel %vm1042, %v1119, %v1121
        %1123 = vrot.lane.b32.xlu0 %v1045, 64
        %v1124 = vpop.permute.xlu0 %1123
        %1125 = vrot.lane.b32.xlu0 %v1047, 64
        %v1126 = vpop.permute.xlu0 %1125
        %1127 = vrot.lane.b32.xlu0 %v1050, 64
        %v1128 = vpop.permute.xlu0 %1127
        %1129 = vrot.lane.b32.xlu0 %v1052, 64
        %v1130 = vpop.permute.xlu0 %1129
        %1131 = vrot.lane.b32.xlu0 %v1055, 64
        %v1132 = vpop.permute.xlu0 %1131
        %1133 = vrot.lane.b32.xlu0 %v1057, 64
        %v1134 = vpop.permute.xlu0 %1133
        %1135 = vrot.lane.b32.xlu0 %v1060, 64
        %v1136 = vpop.permute.xlu0 %1135
        %1137 = vrot.lane.b32.xlu0 %v1062, 64
        %v1138 = vpop.permute.xlu0 %1137
        %1139 = vrot.lane.b32.xlu0 %v1065, 64
        %v1140 = vpop.permute.xlu0 %1139
        %1141 = vrot.lane.b32.xlu0 %v1067, 64
        %v1142 = vpop.permute.xlu0 %1141
        %1143 = vrot.lane.b32.xlu0 %v1070, 64
        %v1144 = vpop.permute.xlu0 %1143
        %1145 = vrot.lane.b32.xlu0 %v1072, 64
        %v1146 = vpop.permute.xlu0 %1145
        %1147 = vrot.lane.b32.xlu0 %v1075, 64
        %v1148 = vpop.permute.xlu0 %1147
        %1149 = vrot.lane.b32.xlu0 %v1077, 64
        %v1150 = vpop.permute.xlu0 %1149
        %1151 = vrot.lane.b32.xlu0 %v1080, 64
        %v1152 = vpop.permute.xlu0 %1151
        %1153 = vrot.lane.b32.xlu0 %v1082, 64
        %v1154 = vpop.permute.xlu0 %1153
        %1155 = vrot.lane.b32.xlu0 %v1085, 64
        %v1156 = vpop.permute.xlu0 %1155
        %1157 = vrot.lane.b32.xlu0 %v1087, 64
        %v1158 = vpop.permute.xlu0 %1157
        %1159 = vrot.lane.b32.xlu0 %v1090, 64
        %v1160 = vpop.permute.xlu0 %1159
        %1161 = vrot.lane.b32.xlu0 %v1092, 64
        %v1162 = vpop.permute.xlu0 %1161
        %1163 = vrot.lane.b32.xlu0 %v1095, 64
        %v1164 = vpop.permute.xlu0 %1163
        %1165 = vrot.lane.b32.xlu0 %v1097, 64
        %v1166 = vpop.permute.xlu0 %1165
        %1167 = vrot.lane.b32.xlu0 %v1100, 64
        %v1168 = vpop.permute.xlu0 %1167
        %1169 = vrot.lane.b32.xlu0 %v1102, 64
        %v1170 = vpop.permute.xlu0 %1169
        %1171 = vrot.lane.b32.xlu0 %v1105, 64
        %v1172 = vpop.permute.xlu0 %1171
        %1173 = vrot.lane.b32.xlu0 %v1107, 64
        %v1174 = vpop.permute.xlu0 %1173
        %1175 = vrot.lane.b32.xlu0 %v1110, 64
        %v1176 = vpop.permute.xlu0 %1175
        %1177 = vrot.lane.b32.xlu0 %v1112, 64
        %v1178 = vpop.permute.xlu0 %1177
        %1179 = vrot.lane.b32.xlu0 %v1115, 64
        %v1180 = vpop.permute.xlu0 %1179
        %1181 = vrot.lane.b32.xlu0 %v1117, 64
        %v1182 = vpop.permute.xlu0 %1181
        %1183 = vrot.lane.b32.xlu0 %v1120, 64
        %v1184 = vpop.permute.xlu0 %1183
        %1185 = vrot.lane.b32.xlu0 %v1122, 64
        %v1186 = vpop.permute.xlu0 %1185
        %1220 = vrot.lane.b32.xlu0 %v800, 96
        %v1221 = vpop.permute.xlu0 %1220
        %1222 = vrot.lane.b32.xlu0 %v704, 96
        %v1223 = vpop.permute.xlu0 %1222
        %1224 = vrot.lane.b32.xlu0 %v801, 96
        %v1225 = vpop.permute.xlu0 %1224
        %1226 = vrot.lane.b32.xlu0 %v707, 96
        %v1227 = vpop.permute.xlu0 %1226
        %1228 = vrot.lane.b32.xlu0 %v802, 96
        %v1229 = vpop.permute.xlu0 %1228
        %1230 = vrot.lane.b32.xlu0 %v710, 96
        %v1231 = vpop.permute.xlu0 %1230
        %1232 = vrot.lane.b32.xlu0 %v803, 96
        %v1233 = vpop.permute.xlu0 %1232
        %1234 = vrot.lane.b32.xlu0 %v713, 96
        %v1235 = vpop.permute.xlu0 %1234
        %1236 = vrot.lane.b32.xlu0 %v804, 96
        %v1237 = vpop.permute.xlu0 %1236
        %1238 = vrot.lane.b32.xlu0 %v716, 96
        %v1239 = vpop.permute.xlu0 %1238
        %1240 = vrot.lane.b32.xlu0 %v805, 96
        %v1241 = vpop.permute.xlu0 %1240
        %1242 = vrot.lane.b32.xlu0 %v719, 96
        %v1243 = vpop.permute.xlu0 %1242
        %1244 = vrot.lane.b32.xlu0 %v806, 96
        %v1245 = vpop.permute.xlu0 %1244
        %1246 = vrot.lane.b32.xlu0 %v722, 96
        %v1247 = vpop.permute.xlu0 %1246
        %1248 = vrot.lane.b32.xlu0 %v807, 96
        %v1249 = vpop.permute.xlu0 %1248
        %1250 = vrot.lane.b32.xlu0 %v725, 96
        %v1251 = vpop.permute.xlu0 %1250
        %1252 = vrot.lane.b32.xlu0 %v808, 96
        %v1253 = vpop.permute.xlu0 %1252
        %1254 = vrot.lane.b32.xlu0 %v728, 96
        %v1255 = vpop.permute.xlu0 %1254
        %1256 = vrot.lane.b32.xlu0 %v809, 96
        %v1257 = vpop.permute.xlu0 %1256
        %1258 = vrot.lane.b32.xlu0 %v731, 96
        %v1259 = vpop.permute.xlu0 %1258
        %1260 = vrot.lane.b32.xlu0 %v810, 96
        %v1261 = vpop.permute.xlu0 %1260
        %1262 = vrot.lane.b32.xlu0 %v734, 96
        %v1263 = vpop.permute.xlu0 %1262
        %1264 = vrot.lane.b32.xlu0 %v811, 96
        %v1265 = vpop.permute.xlu0 %1264
        %1266 = vrot.lane.b32.xlu0 %v737, 96
        %v1267 = vpop.permute.xlu0 %1266
        %1268 = vrot.lane.b32.xlu0 %v812, 96
        %v1269 = vpop.permute.xlu0 %1268
        %1270 = vrot.lane.b32.xlu0 %v740, 96
        %v1271 = vpop.permute.xlu0 %1270
        %1272 = vrot.lane.b32.xlu0 %v813, 96
        %v1273 = vpop.permute.xlu0 %1272
        %1274 = vrot.lane.b32.xlu0 %v743, 96
        %v1275 = vpop.permute.xlu0 %1274
        %1276 = vrot.lane.b32.xlu0 %v814, 96
        %v1277 = vpop.permute.xlu0 %1276
        %1278 = vrot.lane.b32.xlu0 %v746, 96
        %v1279 = vpop.permute.xlu0 %1278
        %1280 = vrot.lane.b32.xlu0 %v815, 96
        %v1281 = vpop.permute.xlu0 %1280
        %1282 = vrot.lane.b32.xlu0 %v749, 96
        %v1283 = vpop.permute.xlu0 %1282
        %v1317 = vrot.slane %v815, 1
        %v1318 = vrot.slane %v749, 1
        %v1319 = vsel %vm865, %v1317, %v1318
        %v1320 = vrot.slane %v832, 1
        %v1321 = vsel %vm865, %v1318, %v1320
        %v1354 = vrot.slane %v815, 2
        %v1355 = vrot.slane %v749, 2
        %v1356 = vsel %vm1042, %v1354, %v1355
        %v1357 = vrot.slane %v832, 2
        %v1358 = vsel %vm1042, %v1355, %v1357
        %1359 = vrot.lane.b32.xlu0 %v1050, 32
        %v1360 = vpop.permute.xlu0 %1359
        %1361 = vrot.lane.b32.xlu0 %v1052, 32
        %v1362 = vpop.permute.xlu0 %1361
        %1363 = vrot.lane.b32.xlu0 %v1055, 32
        %v1364 = vpop.permute.xlu0 %1363
        %1365 = vrot.lane.b32.xlu0 %v1057, 32
        %v1366 = vpop.permute.xlu0 %1365
        %1367 = vrot.lane.b32.xlu0 %v1060, 32
        %v1368 = vpop.permute.xlu0 %1367
        %1369 = vrot.lane.b32.xlu0 %v1062, 32
        %v1370 = vpop.permute.xlu0 %1369
        %1371 = vrot.lane.b32.xlu0 %v1065, 32
        %v1372 = vpop.permute.xlu0 %1371
        %1373 = vrot.lane.b32.xlu0 %v1067, 32
        %v1374 = vpop.permute.xlu0 %1373
        %1375 = vrot.lane.b32.xlu0 %v1070, 32
        %v1376 = vpop.permute.xlu0 %1375
        %1377 = vrot.lane.b32.xlu0 %v1072, 32
        %v1378 = vpop.permute.xlu0 %1377
        %1379 = vrot.lane.b32.xlu0 %v1075, 32
        %v1380 = vpop.permute.xlu0 %1379
        %1381 = vrot.lane.b32.xlu0 %v1077, 32
        %v1382 = vpop.permute.xlu0 %1381
        %1383 = vrot.lane.b32.xlu0 %v1080, 32
        %v1384 = vpop.permute.xlu0 %1383
        %1385 = vrot.lane.b32.xlu0 %v1082, 32
        %v1386 = vpop.permute.xlu0 %1385
        %1387 = vrot.lane.b32.xlu0 %v1085, 32
        %v1388 = vpop.permute.xlu0 %1387
        %1389 = vrot.lane.b32.xlu0 %v1087, 32
        %v1390 = vpop.permute.xlu0 %1389
        %1391 = vrot.lane.b32.xlu0 %v1090, 32
        %v1392 = vpop.permute.xlu0 %1391
        %1393 = vrot.lane.b32.xlu0 %v1092, 32
        %v1394 = vpop.permute.xlu0 %1393
        %1395 = vrot.lane.b32.xlu0 %v1095, 32
        %v1396 = vpop.permute.xlu0 %1395
        %1397 = vrot.lane.b32.xlu0 %v1097, 32
        %v1398 = vpop.permute.xlu0 %1397
        %1399 = vrot.lane.b32.xlu0 %v1100, 32
        %v1400 = vpop.permute.xlu0 %1399
        %1401 = vrot.lane.b32.xlu0 %v1102, 32
        %v1402 = vpop.permute.xlu0 %1401
        %1403 = vrot.lane.b32.xlu0 %v1105, 32
        %v1404 = vpop.permute.xlu0 %1403
        %1405 = vrot.lane.b32.xlu0 %v1107, 32
        %v1406 = vpop.permute.xlu0 %1405
        %1407 = vrot.lane.b32.xlu0 %v1110, 32
        %v1408 = vpop.permute.xlu0 %1407
        %1409 = vrot.lane.b32.xlu0 %v1112, 32
        %v1410 = vpop.permute.xlu0 %1409
        %1411 = vrot.lane.b32.xlu0 %v1115, 32
        %v1412 = vpop.permute.xlu0 %1411
        %1413 = vrot.lane.b32.xlu0 %v1117, 32
        %v1414 = vpop.permute.xlu0 %1413
        %1415 = vrot.lane.b32.xlu0 %v1120, 32
        %v1416 = vpop.permute.xlu0 %1415
        %1417 = vrot.lane.b32.xlu0 %v1122, 32
        %v1418 = vpop.permute.xlu0 %1417
        %1419 = vrot.lane.b32.xlu0 %v1356, 32
        %v1420 = vpop.permute.xlu0 %1419
        %1421 = vrot.lane.b32.xlu0 %v1358, 32
        %v1422 = vpop.permute.xlu0 %1421
        %1455 = vrot.lane.b32.xlu0 %v801, 64
        %v1456 = vpop.permute.xlu0 %1455
        %1457 = vrot.lane.b32.xlu0 %v707, 64
        %v1458 = vpop.permute.xlu0 %1457
        %1459 = vrot.lane.b32.xlu0 %v802, 64
        %v1460 = vpop.permute.xlu0 %1459
        %1461 = vrot.lane.b32.xlu0 %v710, 64
        %v1462 = vpop.permute.xlu0 %1461
        %1463 = vrot.lane.b32.xlu0 %v803, 64
        %v1464 = vpop.permute.xlu0 %1463
        %1465 = vrot.lane.b32.xlu0 %v713, 64
        %v1466 = vpop.permute.xlu0 %1465
        %1467 = vrot.lane.b32.xlu0 %v804, 64
        %v1468 = vpop.permute.xlu0 %1467
        %1469 = vrot.lane.b32.xlu0 %v716, 64
        %v1470 = vpop.permute.xlu0 %1469
        %1471 = vrot.lane.b32.xlu0 %v805, 64
        %v1472 = vpop.permute.xlu0 %1471
        %1473 = vrot.lane.b32.xlu0 %v719, 64
        %v1474 = vpop.permute.xlu0 %1473
        %1475 = vrot.lane.b32.xlu0 %v806, 64
        %v1476 = vpop.permute.xlu0 %1475
        %1477 = vrot.lane.b32.xlu0 %v722, 64
        %v1478 = vpop.permute.xlu0 %1477
        %1479 = vrot.lane.b32.xlu0 %v807, 64
        %v1480 = vpop.permute.xlu0 %1479
        %1481 = vrot.lane.b32.xlu0 %v725, 64
        %v1482 = vpop.permute.xlu0 %1481
        %1483 = vrot.lane.b32.xlu0 %v808, 64
        %v1484 = vpop.permute.xlu0 %1483
        %1485 = vrot.lane.b32.xlu0 %v728, 64
        %v1486 = vpop.permute.xlu0 %1485
        %1487 = vrot.lane.b32.xlu0 %v809, 64
        %v1488 = vpop.permute.xlu0 %1487
        %1489 = vrot.lane.b32.xlu0 %v731, 64
        %v1490 = vpop.permute.xlu0 %1489
        %1491 = vrot.lane.b32.xlu0 %v810, 64
        %v1492 = vpop.permute.xlu0 %1491
        %1493 = vrot.lane.b32.xlu0 %v734, 64
        %v1494 = vpop.permute.xlu0 %1493
        %1495 = vrot.lane.b32.xlu0 %v811, 64
        %v1496 = vpop.permute.xlu0 %1495
        %1497 = vrot.lane.b32.xlu0 %v737, 64
        %v1498 = vpop.permute.xlu0 %1497
        %1499 = vrot.lane.b32.xlu0 %v812, 64
        %v1500 = vpop.permute.xlu0 %1499
        %1501 = vrot.lane.b32.xlu0 %v740, 64
        %v1502 = vpop.permute.xlu0 %1501
        %1503 = vrot.lane.b32.xlu0 %v813, 64
        %v1504 = vpop.permute.xlu0 %1503
        %1505 = vrot.lane.b32.xlu0 %v743, 64
        %v1506 = vpop.permute.xlu0 %1505
        %1507 = vrot.lane.b32.xlu0 %v814, 64
        %v1508 = vpop.permute.xlu0 %1507
        %1509 = vrot.lane.b32.xlu0 %v746, 64
        %v1510 = vpop.permute.xlu0 %1509
        %1511 = vrot.lane.b32.xlu0 %v815, 64
        %v1512 = vpop.permute.xlu0 %1511
        %1513 = vrot.lane.b32.xlu0 %v749, 64
        %v1514 = vpop.permute.xlu0 %1513
        %1515 = vrot.lane.b32.xlu0 %v799, 64
        %v1516 = vpop.permute.xlu0 %1515
        %1517 = vrot.lane.b32.xlu0 %v701, 64
        %v1518 = vpop.permute.xlu0 %1517
        %1551 = vrot.lane.b32.xlu0 %v878, 96
        %v1552 = vpop.permute.xlu0 %1551
        %1553 = vrot.lane.b32.xlu0 %v880, 96
        %v1554 = vpop.permute.xlu0 %1553
        %1555 = vrot.lane.b32.xlu0 %v883, 96
        %v1556 = vpop.permute.xlu0 %1555
        %1557 = vrot.lane.b32.xlu0 %v885, 96
        %v1558 = vpop.permute.xlu0 %1557
        %1559 = vrot.lane.b32.xlu0 %v888, 96
        %v1560 = vpop.permute.xlu0 %1559
        %1561 = vrot.lane.b32.xlu0 %v890, 96
        %v1562 = vpop.permute.xlu0 %1561
        %1563 = vrot.lane.b32.xlu0 %v893, 96
        %v1564 = vpop.permute.xlu0 %1563
        %1565 = vrot.lane.b32.xlu0 %v895, 96
        %v1566 = vpop.permute.xlu0 %1565
        %1567 = vrot.lane.b32.xlu0 %v898, 96
        %v1568 = vpop.permute.xlu0 %1567
        %1569 = vrot.lane.b32.xlu0 %v900, 96
        %v1570 = vpop.permute.xlu0 %1569
        %1571 = vrot.lane.b32.xlu0 %v903, 96
        %v1572 = vpop.permute.xlu0 %1571
        %1573 = vrot.lane.b32.xlu0 %v905, 96
        %v1574 = vpop.permute.xlu0 %1573
        %1575 = vrot.lane.b32.xlu0 %v908, 96
        %v1576 = vpop.permute.xlu0 %1575
        %1577 = vrot.lane.b32.xlu0 %v910, 96
        %v1578 = vpop.permute.xlu0 %1577
        %1579 = vrot.lane.b32.xlu0 %v913, 96
        %v1580 = vpop.permute.xlu0 %1579
        %1581 = vrot.lane.b32.xlu0 %v915, 96
        %v1582 = vpop.permute.xlu0 %1581
        %1583 = vrot.lane.b32.xlu0 %v918, 96
        %v1584 = vpop.permute.xlu0 %1583
        %1585 = vrot.lane.b32.xlu0 %v920, 96
        %v1586 = vpop.permute.xlu0 %1585
        %1587 = vrot.lane.b32.xlu0 %v923, 96
        %v1588 = vpop.permute.xlu0 %1587
        %1589 = vrot.lane.b32.xlu0 %v925, 96
        %v1590 = vpop.permute.xlu0 %1589
        %1591 = vrot.lane.b32.xlu0 %v928, 96
        %v1592 = vpop.permute.xlu0 %1591
        %1593 = vrot.lane.b32.xlu0 %v930, 96
        %v1594 = vpop.permute.xlu0 %1593
        %1595 = vrot.lane.b32.xlu0 %v933, 96
        %v1596 = vpop.permute.xlu0 %1595
        %1597 = vrot.lane.b32.xlu0 %v935, 96
        %v1598 = vpop.permute.xlu0 %1597
        %1599 = vrot.lane.b32.xlu0 %v938, 96
        %v1600 = vpop.permute.xlu0 %1599
        %1601 = vrot.lane.b32.xlu0 %v940, 96
        %v1602 = vpop.permute.xlu0 %1601
        %1603 = vrot.lane.b32.xlu0 %v943, 96
        %v1604 = vpop.permute.xlu0 %1603
        %1605 = vrot.lane.b32.xlu0 %v945, 96
        %v1606 = vpop.permute.xlu0 %1605
        %1607 = vrot.lane.b32.xlu0 %v1319, 96
        %v1608 = vpop.permute.xlu0 %1607
        %1609 = vrot.lane.b32.xlu0 %v1321, 96
        %v1610 = vpop.permute.xlu0 %1609
        %1611 = vrot.lane.b32.xlu0 %v868, 96
        %v1612 = vpop.permute.xlu0 %1611
        %1613 = vrot.lane.b32.xlu0 %v870, 96
        %v1614 = vpop.permute.xlu0 %1613
        %vm1679 = vcmask 261120
        %v1680 = vsel %vm1679, %v799, %v947
        %v1681 = vsel %vm1679, %v701, %v949
        %v1682 = vsel %vm1679, %v800, %v951
        %v1683 = vsel %vm1679, %v704, %v953
        %v1684 = vsel %vm1679, %v801, %v955
        %v1685 = vsel %vm1679, %v707, %v957
        %v1686 = vsel %vm1679, %v802, %v959
        %v1687 = vsel %vm1679, %v710, %v961
        %v1688 = vsel %vm1679, %v803, %v963
        %v1689 = vsel %vm1679, %v713, %v965
        %v1690 = vsel %vm1679, %v804, %v967
        %v1691 = vsel %vm1679, %v716, %v969
        %v1692 = vsel %vm1679, %v805, %v971
        %v1693 = vsel %vm1679, %v719, %v973
        %v1694 = vsel %vm1679, %v806, %v975
        %v1695 = vsel %vm1679, %v722, %v977
        %v1696 = vsel %vm1679, %v807, %v979
        %v1697 = vsel %vm1679, %v725, %v981
        %v1698 = vsel %vm1679, %v808, %v983
        %v1699 = vsel %vm1679, %v728, %v985
        %v1700 = vsel %vm1679, %v809, %v987
        %v1701 = vsel %vm1679, %v731, %v989
        %v1702 = vsel %vm1679, %v810, %v991
        %v1703 = vsel %vm1679, %v734, %v993
        %v1704 = vsel %vm1679, %v811, %v995
        %v1705 = vsel %vm1679, %v737, %v997
        %v1706 = vsel %vm1679, %v812, %v999
        %v1707 = vsel %vm1679, %v740, %v1001
        %v1708 = vsel %vm1679, %v813, %v1003
        %v1709 = vsel %vm1679, %v743, %v1005
        %v1710 = vsel %vm1679, %v814, %v1007
        %v1711 = vsel %vm1679, %v746, %v1009
        %vm1712 = vcmask 523264
        %v1713 = vsel %vm1712, %v1680, %v1124
        %v1714 = vsel %vm1712, %v1681, %v1126
        %v1715 = vsel %vm1712, %v1682, %v1128
        %v1716 = vsel %vm1712, %v1683, %v1130
        %v1717 = vsel %vm1712, %v1684, %v1132
        %v1718 = vsel %vm1712, %v1685, %v1134
        %v1719 = vsel %vm1712, %v1686, %v1136
        %v1720 = vsel %vm1712, %v1687, %v1138
        %v1721 = vsel %vm1712, %v1688, %v1140
        %v1722 = vsel %vm1712, %v1689, %v1142
        %v1723 = vsel %vm1712, %v1690, %v1144
        %v1724 = vsel %vm1712, %v1691, %v1146
        %v1725 = vsel %vm1712, %v1692, %v1148
        %v1726 = vsel %vm1712, %v1693, %v1150
        %v1727 = vsel %vm1712, %v1694, %v1152
        %v1728 = vsel %vm1712, %v1695, %v1154
        %v1729 = vsel %vm1712, %v1696, %v1156
        %v1730 = vsel %vm1712, %v1697, %v1158
        %v1731 = vsel %vm1712, %v1698, %v1160
        %v1732 = vsel %vm1712, %v1699, %v1162
        %v1733 = vsel %vm1712, %v1700, %v1164
        %v1734 = vsel %vm1712, %v1701, %v1166
        %v1735 = vsel %vm1712, %v1702, %v1168
        %v1736 = vsel %vm1712, %v1703, %v1170
        %v1737 = vsel %vm1712, %v1704, %v1172
        %v1738 = vsel %vm1712, %v1705, %v1174
        %v1739 = vsel %vm1712, %v1706, %v1176
        %v1740 = vsel %vm1712, %v1707, %v1178
        %v1741 = vsel %vm1712, %v1708, %v1180
        %v1742 = vsel %vm1712, %v1709, %v1182
        %v1743 = vsel %vm1712, %v1710, %v1184
        %v1744 = vsel %vm1712, %v1711, %v1186
        %vm1745 = vcmask 785408
        %v1746 = vsel %vm1745, %v1713, %v1221
        %v1747 = vsel %vm1745, %v1714, %v1223
        %v1748 = vsel %vm1745, %v1715, %v1225
        %v1749 = vsel %vm1745, %v1716, %v1227
        %v1750 = vsel %vm1745, %v1717, %v1229
        %v1751 = vsel %vm1745, %v1718, %v1231
        %v1752 = vsel %vm1745, %v1719, %v1233
        %v1753 = vsel %vm1745, %v1720, %v1235
        %v1754 = vsel %vm1745, %v1721, %v1237
        %v1755 = vsel %vm1745, %v1722, %v1239
        %v1756 = vsel %vm1745, %v1723, %v1241
        %v1757 = vsel %vm1745, %v1724, %v1243
        %v1758 = vsel %vm1745, %v1725, %v1245
        %v1759 = vsel %vm1745, %v1726, %v1247
        %v1760 = vsel %vm1745, %v1727, %v1249
        %v1761 = vsel %vm1745, %v1728, %v1251
        %v1762 = vsel %vm1745, %v1729, %v1253
        %v1763 = vsel %vm1745, %v1730, %v1255
        %v1764 = vsel %vm1745, %v1731, %v1257
        %v1765 = vsel %vm1745, %v1732, %v1259
        %v1766 = vsel %vm1745, %v1733, %v1261
        %v1767 = vsel %vm1745, %v1734, %v1263
        %v1768 = vsel %vm1745, %v1735, %v1265
        %v1769 = vsel %vm1745, %v1736, %v1267
        %v1770 = vsel %vm1745, %v1737, %v1269
        %v1771 = vsel %vm1745, %v1738, %v1271
        %v1772 = vsel %vm1745, %v1739, %v1273
        %v1773 = vsel %vm1745, %v1740, %v1275
        %v1774 = vsel %vm1745, %v1741, %v1277
        %v1775 = vsel %vm1745, %v1742, %v1279
        %v1776 = vsel %vm1745, %v1743, %v1281
        %v1777 = vsel %vm1745, %v1744, %v1283
        %v1778 = vsel %vm1679, %v873, %v1360
        %v1779 = vsel %vm1679, %v875, %v1362
        %v1780 = vsel %vm1679, %v878, %v1364
        %v1781 = vsel %vm1679, %v880, %v1366
        %v1782 = vsel %vm1679, %v883, %v1368
        %v1783 = vsel %vm1679, %v885, %v1370
        %v1784 = vsel %vm1679, %v888, %v1372
        %v1785 = vsel %vm1679, %v890, %v1374
        %v1786 = vsel %vm1679, %v893, %v1376
        %v1787 = vsel %vm1679, %v895, %v1378
        %v1788 = vsel %vm1679, %v898, %v1380
        %v1789 = vsel %vm1679, %v900, %v1382
        %v1790 = vsel %vm1679, %v903, %v1384
        %v1791 = vsel %vm1679, %v905, %v1386
        %v1792 = vsel %vm1679, %v908, %v1388
        %v1793 = vsel %vm1679, %v910, %v1390
        %v1794 = vsel %vm1679, %v913, %v1392
        %v1795 = vsel %vm1679, %v915, %v1394
        %v1796 = vsel %vm1679, %v918, %v1396
        %v1797 = vsel %vm1679, %v920, %v1398
        %v1798 = vsel %vm1679, %v923, %v1400
        %v1799 = vsel %vm1679, %v925, %v1402
        %v1800 = vsel %vm1679, %v928, %v1404
        %v1801 = vsel %vm1679, %v930, %v1406
        %v1802 = vsel %vm1679, %v933, %v1408
        %v1803 = vsel %vm1679, %v935, %v1410
        %v1804 = vsel %vm1679, %v938, %v1412
        %v1805 = vsel %vm1679, %v940, %v1414
        %v1806 = vsel %vm1679, %v943, %v1416
        %v1807 = vsel %vm1679, %v945, %v1418
        %v1808 = vsel %vm1679, %v1319, %v1420
        %v1809 = vsel %vm1679, %v1321, %v1422
        %v1810 = vsel %vm1712, %v1778, %v1456
        %v1811 = vsel %vm1712, %v1779, %v1458
        %v1812 = vsel %vm1712, %v1780, %v1460
        %v1813 = vsel %vm1712, %v1781, %v1462
        %v1814 = vsel %vm1712, %v1782, %v1464
        %v1815 = vsel %vm1712, %v1783, %v1466
        %v1816 = vsel %vm1712, %v1784, %v1468
        %v1817 = vsel %vm1712, %v1785, %v1470
        %v1818 = vsel %vm1712, %v1786, %v1472
        %v1819 = vsel %vm1712, %v1787, %v1474
        %v1820 = vsel %vm1712, %v1788, %v1476
        %v1821 = vsel %vm1712, %v1789, %v1478
        %v1822 = vsel %vm1712, %v1790, %v1480
        %v1823 = vsel %vm1712, %v1791, %v1482
        %v1824 = vsel %vm1712, %v1792, %v1484
        %v1825 = vsel %vm1712, %v1793, %v1486
        %v1826 = vsel %vm1712, %v1794, %v1488
        %v1827 = vsel %vm1712, %v1795, %v1490
        %v1828 = vsel %vm1712, %v1796, %v1492
        %v1829 = vsel %vm1712, %v1797, %v1494
        %v1830 = vsel %vm1712, %v1798, %v1496
        %v1831 = vsel %vm1712, %v1799, %v1498
        %v1832 = vsel %vm1712, %v1800, %v1500
        %v1833 = vsel %vm1712, %v1801, %v1502
        %v1834 = vsel %vm1712, %v1802, %v1504
        %v1835 = vsel %vm1712, %v1803, %v1506
        %v1836 = vsel %vm1712, %v1804, %v1508
        %v1837 = vsel %vm1712, %v1805, %v1510
        %v1838 = vsel %vm1712, %v1806, %v1512
        %v1839 = vsel %vm1712, %v1807, %v1514
        %v1840 = vsel %vm1712, %v1808, %v1516
        %v1841 = vsel %vm1712, %v1809, %v1518
        %v1842 = vsel %vm1745, %v1810, %v1552
        %v1843 = vsel %vm1745, %v1811, %v1554
        %v1844 = vsel %vm1745, %v1812, %v1556
        %v1845 = vsel %vm1745, %v1813, %v1558
        %v1846 = vsel %vm1745, %v1814, %v1560
        %v1847 = vsel %vm1745, %v1815, %v1562
        %v1848 = vsel %vm1745, %v1816, %v1564
        %v1849 = vsel %vm1745, %v1817, %v1566
        %v1850 = vsel %vm1745, %v1818, %v1568
        %v1851 = vsel %vm1745, %v1819, %v1570
        %v1852 = vsel %vm1745, %v1820, %v1572
        %v1853 = vsel %vm1745, %v1821, %v1574
        %v1854 = vsel %vm1745, %v1822, %v1576
        %v1855 = vsel %vm1745, %v1823, %v1578
        %v1856 = vsel %vm1745, %v1824, %v1580
        %v1857 = vsel %vm1745, %v1825, %v1582
        %v1858 = vsel %vm1745, %v1826, %v1584
        %v1859 = vsel %vm1745, %v1827, %v1586
        %v1860 = vsel %vm1745, %v1828, %v1588
        %v1861 = vsel %vm1745, %v1829, %v1590
        %v1862 = vsel %vm1745, %v1830, %v1592
        %v1863 = vsel %vm1745, %v1831, %v1594
        %v1864 = vsel %vm1745, %v1832, %v1596
        %v1865 = vsel %vm1745, %v1833, %v1598
        %v1866 = vsel %vm1745, %v1834, %v1600
        %v1867 = vsel %vm1745, %v1835, %v1602
        %v1868 = vsel %vm1745, %v1836, %v1604
        %v1869 = vsel %vm1745, %v1837, %v1606
        %v1870 = vsel %vm1745, %v1838, %v1608
        %v1871 = vsel %vm1745, %v1839, %v1610
        %v1872 = vsel %vm1745, %v1840, %v1612
        %v1873 = vsel %vm1745, %v1841, %v1614
        %v1874 = vpack.c.bf16 %v1747, %v1746
        %v1875 = vpack.c.bf16 %v1843, %v1842
        %v1876 = vpack.c.bf16 %v1057, %v1055
        %v1877 = vpack.c.bf16 %v1749, %v1748
        %v1878 = vpack.c.bf16 %v1845, %v1844
        %v1879 = vpack.c.bf16 %v1062, %v1060
        %v1880 = vpack.c.bf16 %v1751, %v1750
        %v1881 = vpack.c.bf16 %v1847, %v1846
        %v1882 = vpack.c.bf16 %v1067, %v1065
        %v1883 = vpack.c.bf16 %v1753, %v1752
        %v1884 = vpack.c.bf16 %v1849, %v1848
        %v1885 = vpack.c.bf16 %v1072, %v1070
        %v1886 = vpack.c.bf16 %v1755, %v1754
        %v1887 = vpack.c.bf16 %v1851, %v1850
        %v1888 = vpack.c.bf16 %v1077, %v1075
        %v1889 = vpack.c.bf16 %v1757, %v1756
        %v1890 = vpack.c.bf16 %v1853, %v1852
        %v1891 = vpack.c.bf16 %v1082, %v1080
        %v1892 = vpack.c.bf16 %v1759, %v1758
        %v1893 = vpack.c.bf16 %v1855, %v1854
        %v1894 = vpack.c.bf16 %v1087, %v1085
        %v1895 = vpack.c.bf16 %v1761, %v1760
        %v1896 = vpack.c.bf16 %v1857, %v1856
        %v1897 = vpack.c.bf16 %v1092, %v1090
        %v1898 = vpack.c.bf16 %v1763, %v1762
        %v1899 = vpack.c.bf16 %v1859, %v1858
        %v1900 = vpack.c.bf16 %v1097, %v1095
        %v1901 = vpack.c.bf16 %v1765, %v1764
        %v1902 = vpack.c.bf16 %v1861, %v1860
        %v1903 = vpack.c.bf16 %v1102, %v1100
        %v1904 = vpack.c.bf16 %v1767, %v1766
        %v1905 = vpack.c.bf16 %v1863, %v1862
        %v1906 = vpack.c.bf16 %v1107, %v1105
        %v1907 = vpack.c.bf16 %v1769, %v1768
        %v1908 = vpack.c.bf16 %v1865, %v1864
        %v1909 = vpack.c.bf16 %v1112, %v1110
        %v1910 = vpack.c.bf16 %v1771, %v1770
        %v1911 = vpack.c.bf16 %v1867, %v1866
        %v1912 = vpack.c.bf16 %v1117, %v1115
        %v1913 = vpack.c.bf16 %v1773, %v1772
        %v1914 = vpack.c.bf16 %v1869, %v1868
        %v1915 = vpack.c.bf16 %v1122, %v1120
        %v1916 = vpack.c.bf16 %v1775, %v1774
        %v1917 = vpack.c.bf16 %v1871, %v1870
        %v1918 = vpack.c.bf16 %v1358, %v1356
        %v1919 = vpack.c.bf16 %v1777, %v1776
        %v1920 = vpack.c.bf16 %v1873, %v1872
        %v1921 = vpack.c.bf16 %v1047, %v1045
        %v1922 = vld [vmem:[%s5] sm:$0xf]
        %v1923 = vld [vmem:[%s5 + $0x4] sm:$0xf]
        %v1924 = vld [vmem:[%s5 + $0x8] sm:$0xf]
        %v1925 = vld [vmem:[%s5 + $0xc] sm:$0xf]
        %v1926 = vld [vmem:[%s5 + $0x10] sm:$0xf]
        %v1927 = vld [vmem:[%s5 + $0x14] sm:$0xf]
        %v1928 = vld [vmem:[%s5 + $0x18] sm:$0xf]
        %v1929 = vld [vmem:[%s5 + $0x1c] sm:$0xf]
        %v1930 = vld [vmem:[%s5 + $0x20] sm:$0xf]
        %v1931 = vld [vmem:[%s5 + $0x24] sm:$0xf]
        %v1932 = vld [vmem:[%s5 + $0x28] sm:$0xf]
        %v1933 = vld [vmem:[%s5 + $0x2c] sm:$0xf]
        %v1934 = vld [vmem:[%s5 + $0x30] sm:$0xf]
        %v1935 = vld [vmem:[%s5 + $0x34] sm:$0xf]
        %v1936 = vld [vmem:[%s5 + $0x38] sm:$0xf]
        %v1937 = vld [vmem:[%s5 + $0x3c] sm:$0xf]
        %v1938 = vld [vmem:[%s5 + $0x40] sm:$0xf]
        %v1939 = vld [vmem:[%s5 + $0x44] sm:$0xf]
        %v1940 = vld [vmem:[%s5 + $0x48] sm:$0xf]
        %v1941 = vld [vmem:[%s5 + $0x4c] sm:$0xf]
        %v1942 = vld [vmem:[%s5 + $0x50] sm:$0xf]
        %v1943 = vld [vmem:[%s5 + $0x54] sm:$0xf]
        %v1944 = vld [vmem:[%s5 + $0x58] sm:$0xf]
        %v1945 = vld [vmem:[%s5 + $0x5c] sm:$0xf]
        %v1946 = vld [vmem:[%s5 + $0x60] sm:$0xf]
        %v1947 = vld [vmem:[%s5 + $0x64] sm:$0xf]
        %v1948 = vld [vmem:[%s5 + $0x68] sm:$0xf]
        %v1949 = vld [vmem:[%s5 + $0x6c] sm:$0xf]
        %v1950 = vld [vmem:[%s5 + $0x70] sm:$0xf]
        %v1951 = vld [vmem:[%s5 + $0x74] sm:$0xf]
        %v1952 = vld [vmem:[%s5 + $0x78] sm:$0xf]
        %v1953 = vld [vmem:[%s5 + $0x7c] sm:$0xf]
        %v1954 = vld [vmem:[%s5 + $0x80] sm:$0xf]
        %v1955 = vld [vmem:[%s5 + $0x84] sm:$0xf]
        %v1956 = vld [vmem:[%s5 + $0x88] sm:$0xf]
        %v1957 = vld [vmem:[%s5 + $0x8c] sm:$0xf]
        %v1994 = vunpack.c.l.b16 %v1922
        %v1995 = vunpack.c.l.b16 %v1923
        %v1996 = vunpack.c.l.b16 %v1924
        %v1997 = vunpack.c.l.b16 %v1925
        %v1998 = vunpack.c.l.b16 %v1926
        %v1999 = vunpack.c.l.b16 %v1927
        %v2000 = vunpack.c.l.b16 %v1928
        %v2001 = vunpack.c.l.b16 %v1929
        %v2002 = vunpack.c.l.b16 %v1930
        %v2003 = vunpack.c.l.b16 %v1931
        %v2004 = vunpack.c.l.b16 %v1932
        %v2005 = vunpack.c.l.b16 %v1933
        %v2006 = vunpack.c.l.b16 %v1934
        %v2007 = vunpack.c.l.b16 %v1935
        %v2008 = vunpack.c.l.b16 %v1936
        %v2009 = vunpack.c.l.b16 %v1937
        %v2010 = vunpack.c.l.b16 %v1938
        %v2011 = vunpack.c.l.b16 %v1939
        %v2012 = vunpack.c.l.b16 %v1940
        %v2013 = vunpack.c.l.b16 %v1941
        %v2014 = vunpack.c.l.b16 %v1942
        %v2015 = vunpack.c.l.b16 %v1943
        %v2016 = vunpack.c.l.b16 %v1944
        %v2017 = vunpack.c.l.b16 %v1945
        %v2018 = vunpack.c.l.b16 %v1946
        %v2019 = vunpack.c.l.b16 %v1947
        %v2020 = vunpack.c.l.b16 %v1948
        %v2021 = vunpack.c.l.b16 %v1949
        %v2022 = vunpack.c.l.b16 %v1950
        %v2023 = vunpack.c.l.b16 %v1951
        %v2024 = vunpack.c.l.b16 %v1952
        %v2025 = vunpack.c.l.b16 %v1953
        %v2026 = vunpack.c.l.b16 %v1954
        %v2027 = vunpack.c.l.b16 %v1955
        %v2028 = vunpack.c.l.b16 %v1956
        %v2029 = vunpack.c.l.b16 %v1957
        %v2030 = vpack.c.b16 %v1995, %v1994
        %v2031 = vpack.c.b16 %v1997, %v1996
        %v2032 = vpack.c.b16 %v1999, %v1998
        %v2033 = vpack.c.b16 %v2001, %v2000
        %v2034 = vpack.c.b16 %v2003, %v2002
        %v2035 = vpack.c.b16 %v2005, %v2004
        %v2036 = vpack.c.b16 %v2007, %v2006
        %v2037 = vpack.c.b16 %v2009, %v2008
        %v2038 = vpack.c.b16 %v2011, %v2010
        %v2039 = vpack.c.b16 %v2013, %v2012
        %v2040 = vpack.c.b16 %v2015, %v2014
        %v2041 = vpack.c.b16 %v2017, %v2016
        %v2042 = vpack.c.b16 %v2019, %v2018
        %v2043 = vpack.c.b16 %v2021, %v2020
        %v2044 = vpack.c.b16 %v2023, %v2022
        %v2045 = vpack.c.b16 %v2025, %v2024
        %v2046 = vpack.c.b16 %v2027, %v2026
        %v2047 = vpack.c.b16 %v2029, %v2028
        %v2067 = vsel %vm1679, %v1876, 0
        %v2070 = vsel %vm1679, %v1879, 0
        %v2073 = vsel %vm1679, %v1882, 0
        %v2076 = vsel %vm1679, %v1885, 0
        %v2079 = vsel %vm1679, %v1888, 0
        %v2082 = vsel %vm1679, %v1891, 0
        %v2085 = vsel %vm1679, %v1894, 0
        %v2088 = vsel %vm1679, %v1897, 0
        %v2091 = vsel %vm1679, %v1900, 0
        %v2094 = vsel %vm1679, %v1903, 0
        %v2097 = vsel %vm1679, %v1906, 0
        %v2100 = vsel %vm1679, %v1909, 0
        %v2103 = vsel %vm1679, %v1912, 0
        %v2106 = vsel %vm1679, %v1915, 0
        %v2109 = vsel %vm1679, %v1918, 0
        %v2112 = vsel %vm1679, %v1921, 0
        %2114 = vmatprep.subr.bf16.mxu0 0
        %2115 = vmatpush1.bf16.msra.mxu0 %v2037
        %2116 = vmatprep.subr.bf16.mxu0 0
        %2117 = vmatpush1.bf16.msra.mxu0 %v2036
        %2118 = vmatprep.subr.bf16.mxu0 0
        %2119 = vmatpush1.bf16.msra.mxu0 %v2035
        %2120 = vmatprep.subr.bf16.mxu0 0
        %2121 = vmatpush1.bf16.msra.mxu0 %v2034
        %2122 = vmatprep.subr.bf16.mxu0 0
        %2123 = vmatpush1.bf16.msra.mxu0 %v2033
        %2124 = vmatprep.subr.bf16.mxu0 0
        %2125 = vmatpush1.bf16.msra.mxu0 %v2032
        %2126 = vmatprep.subr.bf16.mxu0 0
        %2127 = vmatpush1.bf16.msra.mxu0 %v2031
        %2128 = vmatprep.subr.bf16.mxu0 0
        %2129 = vmatpush1.bf16.msra.mxu0 %v2030
        %2130 = vmatprep.subr.bf16.mxu0 0
        %2131 = vmatpush2.bf16.msra.mxu0 %v2045
        %2132 = vmatprep.subr.bf16.mxu0 0
        %2133 = vmatpush2.bf16.msra.mxu0 %v2044
        %2134 = vmatprep.subr.bf16.mxu0 0
        %2135 = vmatpush2.bf16.msra.mxu0 %v2043
        %2136 = vmatprep.subr.bf16.mxu0 0
        %2137 = vmatpush2.bf16.msra.mxu0 %v2042
        %2138 = vmatprep.subr.bf16.mxu0 0
        %2139 = vmatpush2.bf16.msra.mxu0 %v2041
        %2140 = vmatprep.subr.bf16.mxu0 0
        %2141 = vmatpush2.bf16.msra.mxu0 %v2040
        %2142 = vmatprep.subr.bf16.mxu0 0
        %2143 = vmatpush2.bf16.msra.mxu0 %v2039
        %2144 = vmatprep.subr.bf16.mxu0 0
        %2145 = vmatpush2.bf16.msra.mxu0 %v2038
        %2146 = vmatprep.mubr.bf16.mxu0 %v1875
        %2147 = vmatmul.mubr.bf16.gmra.mxu0 %v1874
        %v2148 = vpop.f32.mrf.mxu0
        %v2149 = vadd.f32 0.0, %v2148
        %v2150 = vpop.f32.mrf.mxu0
        %v2151 = vpop.f32.mrf.mxu0
        %v2152 = vadd.f32 0.0, %v2151
        %v2153 = vpop.f32.mrf.mxu0
        %2154 = vmatprep.mubr.bf16.mxu0 %v1878
        %2155 = vmatmul.mubr.bf16.gmra.mxu0 %v1877
        %v2156 = vpop.f32.mrf.mxu0
        %v2157 = vadd.f32 0.0, %v2156
        %v2158 = vpop.f32.mrf.mxu0
        %v2159 = vpop.f32.mrf.mxu0
        %v2160 = vadd.f32 0.0, %v2159
        %v2161 = vpop.f32.mrf.mxu0
        %2162 = vmatprep.mubr.bf16.mxu0 %v1881
        %2163 = vmatmul.mubr.bf16.gmra.mxu0 %v1880
        %v2164 = vpop.f32.mrf.mxu0
        %v2165 = vadd.f32 0.0, %v2164
        %v2166 = vpop.f32.mrf.mxu0
        %v2167 = vpop.f32.mrf.mxu0
        %v2168 = vadd.f32 0.0, %v2167
        %v2169 = vpop.f32.mrf.mxu0
        %2170 = vmatprep.mubr.bf16.mxu0 %v1884
        %2171 = vmatmul.mubr.bf16.gmra.mxu0 %v1883
        %v2172 = vpop.f32.mrf.mxu0
        %v2173 = vadd.f32 0.0, %v2172
        %v2174 = vpop.f32.mrf.mxu0
        %v2175 = vpop.f32.mrf.mxu0
        %v2176 = vadd.f32 0.0, %v2175
        %v2177 = vpop.f32.mrf.mxu0
        %2178 = vmatprep.mubr.bf16.mxu0 %v1887
        %2179 = vmatmul.mubr.bf16.gmra.mxu0 %v1886
        %v2180 = vpop.f32.mrf.mxu0
        %v2181 = vadd.f32 0.0, %v2180
        %v2182 = vpop.f32.mrf.mxu0
        %v2183 = vpop.f32.mrf.mxu0
        %v2184 = vadd.f32 0.0, %v2183
        %v2185 = vpop.f32.mrf.mxu0
        %2186 = vmatprep.mubr.bf16.mxu0 %v1890
        %2187 = vmatmul.mubr.bf16.gmra.mxu0 %v1889
        %v2188 = vpop.f32.mrf.mxu0
        %v2189 = vadd.f32 0.0, %v2188
        %v2190 = vpop.f32.mrf.mxu0
        %v2191 = vpop.f32.mrf.mxu0
        %v2192 = vadd.f32 0.0, %v2191
        %v2193 = vpop.f32.mrf.mxu0
        %2194 = vmatprep.mubr.bf16.mxu0 %v1893
        %2195 = vmatmul.mubr.bf16.gmra.mxu0 %v1892
        %v2196 = vpop.f32.mrf.mxu0
        %v2197 = vadd.f32 0.0, %v2196
        %v2198 = vpop.f32.mrf.mxu0
        %v2199 = vpop.f32.mrf.mxu0
        %v2200 = vadd.f32 0.0, %v2199
        %v2201 = vpop.f32.mrf.mxu0
        %2202 = vmatprep.mubr.bf16.mxu0 %v1896
        %2203 = vmatmul.mubr.bf16.gmra.mxu0 %v1895
        %v2204 = vpop.f32.mrf.mxu0
        %v2205 = vadd.f32 0.0, %v2204
        %v2206 = vpop.f32.mrf.mxu0
        %v2207 = vpop.f32.mrf.mxu0
        %v2208 = vadd.f32 0.0, %v2207
        %v2209 = vpop.f32.mrf.mxu0
        %2210 = vmatprep.mubr.bf16.mxu0 %v1899
        %2211 = vmatmul.mubr.bf16.gmra.mxu0 %v1898
        %v2212 = vpop.f32.mrf.mxu0
        %v2213 = vadd.f32 0.0, %v2212
        %v2214 = vpop.f32.mrf.mxu0
        %v2215 = vpop.f32.mrf.mxu0
        %v2216 = vadd.f32 0.0, %v2215
        %v2217 = vpop.f32.mrf.mxu0
        %2218 = vmatprep.mubr.bf16.mxu0 %v1902
        %2219 = vmatmul.mubr.bf16.gmra.mxu0 %v1901
        %v2220 = vpop.f32.mrf.mxu0
        %v2221 = vadd.f32 0.0, %v2220
        %v2222 = vpop.f32.mrf.mxu0
        %v2223 = vpop.f32.mrf.mxu0
        %v2224 = vadd.f32 0.0, %v2223
        %v2225 = vpop.f32.mrf.mxu0
        %2226 = vmatprep.mubr.bf16.mxu0 %v1905
        %2227 = vmatmul.mubr.bf16.gmra.mxu0 %v1904
        %v2228 = vpop.f32.mrf.mxu0
        %v2229 = vadd.f32 0.0, %v2228
        %v2230 = vpop.f32.mrf.mxu0
        %v2231 = vpop.f32.mrf.mxu0
        %v2232 = vadd.f32 0.0, %v2231
        %v2233 = vpop.f32.mrf.mxu0
        %2234 = vmatprep.mubr.bf16.mxu0 %v1908
        %2235 = vmatmul.mubr.bf16.gmra.mxu0 %v1907
        %v2236 = vpop.f32.mrf.mxu0
        %v2237 = vadd.f32 0.0, %v2236
        %v2238 = vpop.f32.mrf.mxu0
        %v2239 = vpop.f32.mrf.mxu0
        %v2240 = vadd.f32 0.0, %v2239
        %v2241 = vpop.f32.mrf.mxu0
        %2242 = vmatprep.mubr.bf16.mxu0 %v1911
        %2243 = vmatmul.mubr.bf16.gmra.mxu0 %v1910
        %v2244 = vpop.f32.mrf.mxu0
        %v2245 = vadd.f32 0.0, %v2244
        %v2246 = vpop.f32.mrf.mxu0
        %v2247 = vpop.f32.mrf.mxu0
        %v2248 = vadd.f32 0.0, %v2247
        %v2249 = vpop.f32.mrf.mxu0
        %2250 = vmatprep.mubr.bf16.mxu0 %v1914
        %2251 = vmatmul.mubr.bf16.gmra.mxu0 %v1913
        %v2252 = vpop.f32.mrf.mxu0
        %v2253 = vadd.f32 0.0, %v2252
        %v2254 = vpop.f32.mrf.mxu0
        %v2255 = vpop.f32.mrf.mxu0
        %v2256 = vadd.f32 0.0, %v2255
        %v2257 = vpop.f32.mrf.mxu0
        %2258 = vmatprep.mubr.bf16.mxu0 %v1917
        %2259 = vmatmul.mubr.bf16.gmra.mxu0 %v1916
        %v2260 = vpop.f32.mrf.mxu0
        %v2261 = vadd.f32 0.0, %v2260
        %v2262 = vpop.f32.mrf.mxu0
        %v2263 = vpop.f32.mrf.mxu0
        %v2264 = vadd.f32 0.0, %v2263
        %v2265 = vpop.f32.mrf.mxu0
        %2266 = vmatprep.mubr.bf16.mxu0 %v1920
        %2267 = vmatmul.mubr.bf16.gmra.mxu0 %v1919
        %v2268 = vpop.f32.mrf.mxu0
        %v2269 = vadd.f32 0.0, %v2268
        %v2270 = vpop.f32.mrf.mxu0
        %v2271 = vpop.f32.mrf.mxu0
        %v2272 = vadd.f32 0.0, %v2271
        %v2273 = vpop.f32.mrf.mxu0
        %2274 = vdwg.mxu0
        %2275 = vmatprep.subr.bf16.mxu0 0
        %2276 = vmatpush1.bf16.msra.mxu0 0
        %2277 = vmatprep.subr.bf16.mxu0 0
        %2278 = vmatpush1.bf16.msra.mxu0 0
        %2279 = vmatprep.subr.bf16.mxu0 0
        %2280 = vmatpush1.bf16.msra.mxu0 0
        %2281 = vmatprep.subr.bf16.mxu0 0
        %2282 = vmatpush1.bf16.msra.mxu0 0
        %2283 = vmatprep.subr.bf16.mxu0 0
        %2284 = vmatpush1.bf16.msra.mxu0 0
        %2285 = vmatprep.subr.bf16.mxu0 0
        %2286 = vmatpush1.bf16.msra.mxu0 0
        %2287 = vmatprep.subr.bf16.mxu0 0
        %2288 = vmatpush1.bf16.msra.mxu0 %v2047
        %2289 = vmatprep.subr.bf16.mxu0 0
        %2290 = vmatpush1.bf16.msra.mxu0 %v2046
        %2291 = vmatprep.subr.bf16.mxu0 0
        %2292 = vmatpush2.bf16.msra.mxu0 0
        %2293 = vmatprep.subr.bf16.mxu0 0
        %2294 = vmatpush2.bf16.msra.mxu0 0
        %2295 = vmatprep.subr.bf16.mxu0 0
        %2296 = vmatpush2.bf16.msra.mxu0 0
        %2297 = vmatprep.subr.bf16.mxu0 0
        %2298 = vmatpush2.bf16.msra.mxu0 0
        %2299 = vmatprep.subr.bf16.mxu0 0
        %2300 = vmatpush2.bf16.msra.mxu0 0
        %2301 = vmatprep.subr.bf16.mxu0 0
        %2302 = vmatpush2.bf16.msra.mxu0 0
        %2303 = vmatprep.subr.bf16.mxu0 0
        %2304 = vmatpush2.bf16.msra.mxu0 0
        %2305 = vmatprep.subr.bf16.mxu0 0
        %2306 = vmatpush2.bf16.msra.mxu0 0
        %2307 = vmatprep.mubr.bf16.mxu0 0
        %2308 = vmatmul.mubr.bf16.gmra.mxu0 %v2067
        %v2309 = vpop.f32.mrf.mxu0
        %v2310 = vadd.f32 %v2149, %v2309
        %v2311 = vpop.f32.mrf.mxu0
        %v2312 = vpop.f32.mrf.mxu0
        %v2313 = vadd.f32 %v2152, %v2312
        %v2314 = vpop.f32.mrf.mxu0
        %2315 = vmatprep.mubr.bf16.mxu0 0
        %2316 = vmatmul.mubr.bf16.gmra.mxu0 %v2070
        %v2317 = vpop.f32.mrf.mxu0
        %v2318 = vadd.f32 %v2157, %v2317
        %v2319 = vpop.f32.mrf.mxu0
        %v2320 = vpop.f32.mrf.mxu0
        %v2321 = vadd.f32 %v2160, %v2320
        %v2322 = vpop.f32.mrf.mxu0
        %2323 = vmatprep.mubr.bf16.mxu0 0
        %2324 = vmatmul.mubr.bf16.gmra.mxu0 %v2073
        %v2325 = vpop.f32.mrf.mxu0
        %v2326 = vadd.f32 %v2165, %v2325
        %v2327 = vpop.f32.mrf.mxu0
        %v2328 = vpop.f32.mrf.mxu0
        %v2329 = vadd.f32 %v2168, %v2328
        %v2330 = vpop.f32.mrf.mxu0
        %2331 = vmatprep.mubr.bf16.mxu0 0
        %2332 = vmatmul.mubr.bf16.gmra.mxu0 %v2076
        %v2333 = vpop.f32.mrf.mxu0
        %v2334 = vadd.f32 %v2173, %v2333
        %v2335 = vpop.f32.mrf.mxu0
        %v2336 = vpop.f32.mrf.mxu0
        %v2337 = vadd.f32 %v2176, %v2336
        %v2338 = vpop.f32.mrf.mxu0
        %2339 = vmatprep.mubr.bf16.mxu0 0
        %2340 = vmatmul.mubr.bf16.gmra.mxu0 %v2079
        %v2341 = vpop.f32.mrf.mxu0
        %v2342 = vadd.f32 %v2181, %v2341
        %v2343 = vpop.f32.mrf.mxu0
        %v2344 = vpop.f32.mrf.mxu0
        %v2345 = vadd.f32 %v2184, %v2344
        %v2346 = vpop.f32.mrf.mxu0
        %2347 = vmatprep.mubr.bf16.mxu0 0
        %2348 = vmatmul.mubr.bf16.gmra.mxu0 %v2082
        %v2349 = vpop.f32.mrf.mxu0
        %v2350 = vadd.f32 %v2189, %v2349
        %v2351 = vpop.f32.mrf.mxu0
        %v2352 = vpop.f32.mrf.mxu0
        %v2353 = vadd.f32 %v2192, %v2352
        %v2354 = vpop.f32.mrf.mxu0
        %2355 = vmatprep.mubr.bf16.mxu0 0
        %2356 = vmatmul.mubr.bf16.gmra.mxu0 %v2085
        %v2357 = vpop.f32.mrf.mxu0
        %v2358 = vadd.f32 %v2197, %v2357
        %v2359 = vpop.f32.mrf.mxu0
        %v2360 = vpop.f32.mrf.mxu0
        %v2361 = vadd.f32 %v2200, %v2360
        %v2362 = vpop.f32.mrf.mxu0
        %2363 = vmatprep.mubr.bf16.mxu0 0
        %2364 = vmatmul.mubr.bf16.gmra.mxu0 %v2088
        %v2365 = vpop.f32.mrf.mxu0
        %v2366 = vadd.f32 %v2205, %v2365
        %v2367 = vpop.f32.mrf.mxu0
        %v2368 = vpop.f32.mrf.mxu0
        %v2369 = vadd.f32 %v2208, %v2368
        %v2370 = vpop.f32.mrf.mxu0
        %2371 = vmatprep.mubr.bf16.mxu0 0
        %2372 = vmatmul.mubr.bf16.gmra.mxu0 %v2091
        %v2373 = vpop.f32.mrf.mxu0
        %v2374 = vadd.f32 %v2213, %v2373
        %v2375 = vpop.f32.mrf.mxu0
        %v2376 = vpop.f32.mrf.mxu0
        %v2377 = vadd.f32 %v2216, %v2376
        %v2378 = vpop.f32.mrf.mxu0
        %2379 = vmatprep.mubr.bf16.mxu0 0
        %2380 = vmatmul.mubr.bf16.gmra.mxu0 %v2094
        %v2381 = vpop.f32.mrf.mxu0
        %v2382 = vadd.f32 %v2221, %v2381
        %v2383 = vpop.f32.mrf.mxu0
        %v2384 = vpop.f32.mrf.mxu0
        %v2385 = vadd.f32 %v2224, %v2384
        %v2386 = vpop.f32.mrf.mxu0
        %2387 = vmatprep.mubr.bf16.mxu0 0
        %2388 = vmatmul.mubr.bf16.gmra.mxu0 %v2097
        %v2389 = vpop.f32.mrf.mxu0
        %v2390 = vadd.f32 %v2229, %v2389
        %v2391 = vpop.f32.mrf.mxu0
        %v2392 = vpop.f32.mrf.mxu0
        %v2393 = vadd.f32 %v2232, %v2392
        %v2394 = vpop.f32.mrf.mxu0
        %2395 = vmatprep.mubr.bf16.mxu0 0
        %2396 = vmatmul.mubr.bf16.gmra.mxu0 %v2100
        %v2397 = vpop.f32.mrf.mxu0
        %v2398 = vadd.f32 %v2237, %v2397
        %v2399 = vpop.f32.mrf.mxu0
        %v2400 = vpop.f32.mrf.mxu0
        %v2401 = vadd.f32 %v2240, %v2400
        %v2402 = vpop.f32.mrf.mxu0
        %2403 = vmatprep.mubr.bf16.mxu0 0
        %2404 = vmatmul.mubr.bf16.gmra.mxu0 %v2103
        %v2405 = vpop.f32.mrf.mxu0
        %v2406 = vadd.f32 %v2245, %v2405
        %v2407 = vpop.f32.mrf.mxu0
        %v2408 = vpop.f32.mrf.mxu0
        %v2409 = vadd.f32 %v2248, %v2408
        %v2410 = vpop.f32.mrf.mxu0
        %2411 = vmatprep.mubr.bf16.mxu0 0
        %2412 = vmatmul.mubr.bf16.gmra.mxu0 %v2106
        %v2413 = vpop.f32.mrf.mxu0
        %v2414 = vadd.f32 %v2253, %v2413
        %v2415 = vpop.f32.mrf.mxu0
        %v2416 = vpop.f32.mrf.mxu0
        %v2417 = vadd.f32 %v2256, %v2416
        %v2418 = vpop.f32.mrf.mxu0
        %2419 = vmatprep.mubr.bf16.mxu0 0
        %2420 = vmatmul.mubr.bf16.gmra.mxu0 %v2109
        %v2421 = vpop.f32.mrf.mxu0
        %v2422 = vadd.f32 %v2261, %v2421
        %v2423 = vpop.f32.mrf.mxu0
        %v2424 = vpop.f32.mrf.mxu0
        %v2425 = vadd.f32 %v2264, %v2424
        %v2426 = vpop.f32.mrf.mxu0
        %2427 = vmatprep.mubr.bf16.mxu0 0
        %2428 = vmatmul.mubr.bf16.gmra.mxu0 %v2112
        %v2429 = vpop.f32.mrf.mxu0
        %v2430 = vadd.f32 %v2269, %v2429
        %v2431 = vpop.f32.mrf.mxu0
        %v2432 = vpop.f32.mrf.mxu0
        %v2433 = vadd.f32 %v2272, %v2432
        %v2434 = vpop.f32.mrf.mxu0
        %2435 = vdwg.mxu0
        %2468 = vrot.lane.b32.xlu0 %v2310, 16
        %v2469 = vpop.permute.xlu0 %2468
        %2470 = vrot.lane.b32.xlu0 %v2313, 16
        %v2471 = vpop.permute.xlu0 %2470
        %2472 = vrot.lane.b32.xlu0 %v2318, 16
        %v2473 = vpop.permute.xlu0 %2472
        %2474 = vrot.lane.b32.xlu0 %v2321, 16
        %v2475 = vpop.permute.xlu0 %2474
        %2476 = vrot.lane.b32.xlu0 %v2326, 16
        %v2477 = vpop.permute.xlu0 %2476
        %2478 = vrot.lane.b32.xlu0 %v2329, 16
        %v2479 = vpop.permute.xlu0 %2478
        %2480 = vrot.lane.b32.xlu0 %v2334, 16
        %v2481 = vpop.permute.xlu0 %2480
        %2482 = vrot.lane.b32.xlu0 %v2337, 16
        %v2483 = vpop.permute.xlu0 %2482
        %2484 = vrot.lane.b32.xlu0 %v2342, 16
        %v2485 = vpop.permute.xlu0 %2484
        %2486 = vrot.lane.b32.xlu0 %v2345, 16
        %v2487 = vpop.permute.xlu0 %2486
        %2488 = vrot.lane.b32.xlu0 %v2350, 16
        %v2489 = vpop.permute.xlu0 %2488
        %2490 = vrot.lane.b32.xlu0 %v2353, 16
        %v2491 = vpop.permute.xlu0 %2490
        %2492 = vrot.lane.b32.xlu0 %v2358, 16
        %v2493 = vpop.permute.xlu0 %2492
        %2494 = vrot.lane.b32.xlu0 %v2361, 16
        %v2495 = vpop.permute.xlu0 %2494
        %2496 = vrot.lane.b32.xlu0 %v2366, 16
        %v2497 = vpop.permute.xlu0 %2496
        %2498 = vrot.lane.b32.xlu0 %v2369, 16
        %v2499 = vpop.permute.xlu0 %2498
        %2500 = vrot.lane.b32.xlu0 %v2374, 16
        %v2501 = vpop.permute.xlu0 %2500
        %2502 = vrot.lane.b32.xlu0 %v2377, 16
        %v2503 = vpop.permute.xlu0 %2502
        %2504 = vrot.lane.b32.xlu0 %v2382, 16
        %v2505 = vpop.permute.xlu0 %2504
        %2506 = vrot.lane.b32.xlu0 %v2385, 16
        %v2507 = vpop.permute.xlu0 %2506
        %2508 = vrot.lane.b32.xlu0 %v2390, 16
        %v2509 = vpop.permute.xlu0 %2508
        %2510 = vrot.lane.b32.xlu0 %v2393, 16
        %v2511 = vpop.permute.xlu0 %2510
        %2512 = vrot.lane.b32.xlu0 %v2398, 16
        %v2513 = vpop.permute.xlu0 %2512
        %2514 = vrot.lane.b32.xlu0 %v2401, 16
        %v2515 = vpop.permute.xlu0 %2514
        %2516 = vrot.lane.b32.xlu0 %v2406, 16
        %v2517 = vpop.permute.xlu0 %2516
        %2518 = vrot.lane.b32.xlu0 %v2409, 16
        %v2519 = vpop.permute.xlu0 %2518
        %2520 = vrot.lane.b32.xlu0 %v2414, 16
        %v2521 = vpop.permute.xlu0 %2520
        %2522 = vrot.lane.b32.xlu0 %v2417, 16
        %v2523 = vpop.permute.xlu0 %2522
        %2524 = vrot.lane.b32.xlu0 %v2422, 16
        %v2525 = vpop.permute.xlu0 %2524
        %2526 = vrot.lane.b32.xlu0 %v2425, 16
        %v2527 = vpop.permute.xlu0 %2526
        %2528 = vrot.lane.b32.xlu0 %v2430, 16
        %v2529 = vpop.permute.xlu0 %2528
        %2530 = vrot.lane.b32.xlu0 %v2433, 16
        %v2531 = vpop.permute.xlu0 %2530
        %v2564 = vsel %vm424, %v251, %v2469
        %v2565 = vsel %vm424, %v252, %v2471
        %v2566 = vsel %vm424, %v253, %v2473
        %v2567 = vsel %vm424, %v254, %v2475
        %v2568 = vsel %vm424, %v255, %v2477
        %v2569 = vsel %vm424, %v256, %v2479
        %v2570 = vsel %vm424, %v257, %v2481
        %v2571 = vsel %vm424, %v258, %v2483
        %v2572 = vsel %vm424, %v259, %v2485
        %v2573 = vsel %vm424, %v260, %v2487
        %v2574 = vsel %vm424, %v261, %v2489
        %v2575 = vsel %vm424, %v262, %v2491
        %v2576 = vsel %vm424, %v263, %v2493
        %v2577 = vsel %vm424, %v264, %v2495
        %v2578 = vsel %vm424, %v265, %v2497
        %v2579 = vsel %vm424, %v266, %v2499
        %v2580 = vsel %vm424, %v267, %v2501
        %v2581 = vsel %vm424, %v268, %v2503
        %v2582 = vsel %vm424, %v269, %v2505
        %v2583 = vsel %vm424, %v270, %v2507
        %v2584 = vsel %vm424, %v271, %v2509
        %v2585 = vsel %vm424, %v272, %v2511
        %v2586 = vsel %vm424, %v273, %v2513
        %v2587 = vsel %vm424, %v274, %v2515
        %v2588 = vsel %vm424, %v275, %v2517
        %v2589 = vsel %vm424, %v276, %v2519
        %v2590 = vsel %vm424, %v277, %v2521
        %v2591 = vsel %vm424, %v278, %v2523
        %v2592 = vsel %vm424, %v279, %v2525
        %v2593 = vsel %vm424, %v280, %v2527
        %v2594 = vsel %vm424, %v281, %v2529
        %v2595 = vsel %vm424, %v282, %v2531
        %vm2596 = vcmask 195584
        %2597 = vst.msk [vmem:[%s244] sm:$0xff] %vm2596, %v2564
        %2598 = vst.msk [vmem:[%s244 + $0x8] sm:$0xff] %vm2596, %v2565
        %2599 = vst.msk [vmem:[%s244 + $0x10] sm:$0xff] %vm2596, %v2566
        %2600 = vst.msk [vmem:[%s244 + $0x18] sm:$0xff] %vm2596, %v2567
        %2601 = vst.msk [vmem:[%s244 + $0x20] sm:$0xff] %vm2596, %v2568
        %2602 = vst.msk [vmem:[%s244 + $0x28] sm:$0xff] %vm2596, %v2569
        %2603 = vst.msk [vmem:[%s244 + $0x30] sm:$0xff] %vm2596, %v2570
        %2604 = vst.msk [vmem:[%s244 + $0x38] sm:$0xff] %vm2596, %v2571
        %2605 = vst.msk [vmem:[%s244 + $0x40] sm:$0xff] %vm2596, %v2572
        %2606 = vst.msk [vmem:[%s244 + $0x48] sm:$0xff] %vm2596, %v2573
        %2607 = vst.msk [vmem:[%s244 + $0x50] sm:$0xff] %vm2596, %v2574
        %2608 = vst.msk [vmem:[%s244 + $0x58] sm:$0xff] %vm2596, %v2575
        %2609 = vst.msk [vmem:[%s244 + $0x60] sm:$0xff] %vm2596, %v2576
        %2610 = vst.msk [vmem:[%s244 + $0x68] sm:$0xff] %vm2596, %v2577
        %2611 = vst.msk [vmem:[%s244 + $0x70] sm:$0xff] %vm2596, %v2578
        %2612 = vst.msk [vmem:[%s244 + $0x78] sm:$0xff] %vm2596, %v2579
        %2613 = vst.msk [vmem:[%s244 + $0x80] sm:$0xff] %vm2596, %v2580
        %2614 = vst.msk [vmem:[%s244 + $0x88] sm:$0xff] %vm2596, %v2581
        %2615 = vst.msk [vmem:[%s244 + $0x90] sm:$0xff] %vm2596, %v2582
        %2616 = vst.msk [vmem:[%s244 + $0x98] sm:$0xff] %vm2596, %v2583
        %2617 = vst.msk [vmem:[%s244 + $0xa0] sm:$0xff] %vm2596, %v2584
        %2618 = vst.msk [vmem:[%s244 + $0xa8] sm:$0xff] %vm2596, %v2585
        %2619 = vst.msk [vmem:[%s244 + $0xb0] sm:$0xff] %vm2596, %v2586
        %2620 = vst.msk [vmem:[%s244 + $0xb8] sm:$0xff] %vm2596, %v2587
        %2621 = vst.msk [vmem:[%s244 + $0xc0] sm:$0xff] %vm2596, %v2588
        %2622 = vst.msk [vmem:[%s244 + $0xc8] sm:$0xff] %vm2596, %v2589
        %2623 = vst.msk [vmem:[%s244 + $0xd0] sm:$0xff] %vm2596, %v2590
        %2624 = vst.msk [vmem:[%s244 + $0xd8] sm:$0xff] %vm2596, %v2591
        %2625 = vst.msk [vmem:[%s244 + $0xe0] sm:$0xff] %vm2596, %v2592
        %2626 = vst.msk [vmem:[%s244 + $0xe8] sm:$0xff] %vm2596, %v2593
        %2627 = vst.msk [vmem:[%s244 + $0xf0] sm:$0xff] %vm2596, %v2594
        %2628 = vst.msk [vmem:[%s244 + $0xf8] sm:$0xff] %vm2596, %v2595
        %s2629 = sand.u32 %s159, 1
        %s2630 = scalar_lea.sflag [#allocation3], %s2629
        %s2631 = sand.u32 %s159, 1
        %s2632 = smul.addr %s2631, 256
        %s2633 = scalar_lea.vmem [#allocation2], %s2632
        // Predicated region
        $region45: #{dense_unit_forward.1} parent=43 // pred_check
          %p2634 = pneg %p169
        $region46: #{dense_unit_forward.1} parent=43 // pred_check_branch
          %2636 = sbr.rel (%p2634) target = $region48
        $region47: #{dense_unit_forward.1} parent=43 // pred_region
          %s2638 = ssub.s32 4096, 4096
          %2639 = vsyncadd %s2630, %s2638
          %s2640 = smul.addr %s20, 32
          %s2641 = smul.addr %s2640, 128
          %s2642 = scalar_lea.hbm %s6, %s2641
          %s2643 = sshll.u32 %s2633, 4
          %s2644 = int_to_ptr.vmem [resolvable:$true] %s2643
          %2649 = dma.vmem_to_hbm [thread:$0]  %s2644, 4096, %s2642, %s2630, 128, 128, 8
        $region48: #{dense_unit_forward.1} parent=43 // pred_fallthru
          _
      $region44: #{dense_unit_forward.1} parent=5 // pred_fallthru
        _
      %p2650 = scmp.le.s32.totalorder 2, %s15
      // Predicated region
      $region49: #{dense_unit_forward.1} parent=5 // pred_check
        %p2651 = pneg %p2650
      $region50: #{dense_unit_forward.1} parent=5 // pred_check_branch
        %2653 = sbr.rel (%p2651) target = $region52
      $region51: #{dense_unit_forward.1} parent=5 // pred_region
        %s2654 = ssub.s32 %s15, 2
        // Predicated region
        $region53: #{dense_unit_forward.1} parent=51 // pred_check
          %p2655 = pneg %p175
        $region54: #{dense_unit_forward.1} parent=51 // pred_check_branch
          %2657 = sbr.rel (%p2655) target = $region56
        $region55: #{dense_unit_forward.1} parent=51 // pred_region
          %s2658 = sand.u32 %s160, 1
          %s2659 = scalar_lea.sflag [#allocation3], %s2658
          %s2660 = sand.u32 %s160, 1
          %s2661 = smul.addr %s2660, 256
          %s2662 = scalar_lea.vmem [#allocation2], %s2661
          %2663 = dma.done %s2659, 4096
        $region56: #{dense_unit_forward.1} parent=51 // pred_fallthru
          _
      $region52: #{dense_unit_forward.1} parent=5 // pred_fallthru
        _
    $region6: #{dense_unit_forward.1} parent=1 // loop_footer
      %s19 = sadd.s32 1, %s15
    $region7: #{dense_unit_forward.1} parent=1 // loop_footer_branch
      %14 = sbr.rel target = $region3
    $region8: #{dense_unit_forward.1} parent=1 // loop_exit
      _
    %2664 = vsyncpa [#allocation3], 1
    %s2665 = scalar_lea.sflag [#allocation3], 1
    %2666 = vsyncpa %s2665, 1

</llo_original>
